<compile_context>
chip_gen: v7x
topology: tpu7x:2x2x1
jax: 0.10.0
libtpu: 0.0.40
codegen_flags: <defaults>
</compile_context>

<pallas_src>
import math
import functools

import jax
import jax.numpy as jnp
from jax import lax
from jax.experimental import pallas as pl
from jax.experimental.pallas import tpu as pltpu


def _layernorm(x, gamma, beta, eps=1e-6):
    # eps=1e-6 matches SublayerConnection(nn.LayerNorm(hidden_dim, eps=1e-06)).
    mu = jnp.mean(x, axis=-1, keepdims=True)
    var = jnp.mean((x - mu) ** 2, axis=-1, keepdims=True)
    return (x - mu) * lax.rsqrt(var + eps) * gamma + beta


def _gelu_exact(x):
    # nn.GELU() default: exact erf-based GELU.
    return 0.5 * x * (1.0 + lax.erf(x / math.sqrt(2.0)))


def encoder_kernel(
    seq_ref, bias_ref,
    wq_ref, bq_ref, wk_ref, bk_ref, wv_ref, bv_ref, wo_ref, bo_ref,
    g1_ref, be1_ref, w1_ref, b1_ref, w2_ref, b2_ref, g2_ref, be2_ref,
    out_ref,
    q_s, k_s, v_s,
    *, head_num, ff_chunks, matmul_dtype, exp_dtype,
):
    """Grid is (batch,).  One grid step = one full encoder block for one batch
    element: fused full-width Q/K/V projections -> per-head attention ->
    output projection (accumulated per head) -> LN/residual -> chunked FFN ->
    LN/residual."""
    S, H = q_s.shape
    hd = H // head_num
    md = matmul_dtype
    exp_in_f32 = (exp_dtype == jnp.float32)

    x = seq_ref[0]                       # (S, H) f32
    x_md = x.astype(md)                  # cast once per batch

    # --- fused projections for ALL heads: full H-wide MXU output ------------
    # (scale is pre-folded into wq/bq in the wrapper; weights are (H, H) in
    # standard (K, N) layout so the contraction is on rhs dim 0.)
    q_s[...] = (jnp.dot(x_md, wq_ref[...], preferred_element_type=jnp.float32)
                + bq_ref[...]).astype(q_s.dtype)
    k_s[...] = (jnp.dot(x_md, wk_ref[...], preferred_element_type=jnp.float32)
                + bk_ref[...]).astype(k_s.dtype)
    v_s[...] = (jnp.dot(x_md, wv_ref[...], preferred_element_type=jnp.float32)
                + bv_ref[...]).astype(v_s.dtype)

    bias = bias_ref[0, 0]                # (S, S) additive mask bias (f32)

    # --- per-head attention; output projection accumulated across heads -----
    attn_acc = jnp.zeros((S, H), jnp.float32)
    for h in range(head_num):            # static unroll (head_num is small)
        sl = slice(h * hd, (h + 1) * hd)
        qh = q_s[:, sl]                  # (S, hd) md
        kh = k_s[:, sl]
        vh = v_s[:, sl]

        # scores: NT-form contraction is the natural attention form (no
        # explicit K transpose); additive mask bias = single add.
        scores = jnp.einsum("qd,kd->qk", qh, kh,
                            preferred_element_type=jnp.float32) + bias
        m = jnp.max(scores, axis=-1, keepdims=True)
        if exp_in_f32:
            e = jnp.exp(scores - m)
            denom = jnp.sum(e, axis=-1, keepdims=True)
            p = e.astype(md)
        else:
            # bf16 EUP exp (v6e/v7x fast path; do not use on v5e).
            p = jnp.exp((scores - m).astype(exp_dtype))
            denom = jnp.sum(p, axis=-1, keepdims=True, dtype=jnp.float32)
            p = p.astype(md)

        # normalize after the V matmul (smaller tensor) on the EUP.
        ctx = jnp.einsum("qk,kd->qd", p, vh,
                         preferred_element_type=jnp.float32)
        ctx = ctx * pl.reciprocal(denom, approx=True)
        # attention dropout: identity (eval mode)

        # this head's slice of the output projection: (S,hd)@(hd,H), full
        # H-wide MXU output, accumulated in f32.
        attn_acc = attn_acc + jnp.dot(ctx.astype(md), wo_ref[sl, :],
                                      preferred_element_type=jnp.float32)

    # --- residual + LN, FFN (F-chunked fori_loop), residual + LN -------------
    attn_seq = attn_acc + bo_ref[...]                      # (S, H)
    x1 = x + _layernorm(attn_seq, g1_ref[...], be1_ref[...])

    x1_md = x1.astype(md)

    def ff_body(c, acc):
        # w1_ref[c]: (H, ffc), w2_ref[c]: (ffc, H) -- leading-dim chunk index.
        h1 = (jnp.dot(x1_md, w1_ref[c], preferred_element_type=jnp.float32)
              + b1_ref[c])
        h1 = _gelu_exact(h1)                               # dropout: identity
        return acc + jnp.dot(h1.astype(md), w2_ref[c],
                             preferred_element_type=jnp.float32)

    ffn = lax.fori_loop(0, ff_chunks, ff_body,
                        jnp.zeros((S, H), jnp.float32),
                        unroll=(ff_chunks <= 4))
    ffn = ffn + b2_ref[...]

    x2 = x1 + _layernorm(ffn, g2_ref[...], be2_ref[...])
    # final dropout: identity (eval mode)
    out_ref[0] = x2.astype(out_ref.dtype)


def _vmem_capacity_bytes():
    """Physical VMEM of the local chip (128 MiB v5e/v6e, 64 MiB v7x)."""
    try:
        return int(pltpu.get_tpu_info().vmem_capacity_bytes)
    except Exception:  # probe only; conservative (v7x-sized) fallback
        return 64 << 20


def transformer_encoder(seq, mask, params, *, head_num,
                        matmul_dtype=jnp.bfloat16, exp_dtype=jnp.float32,
                        ff_chunk=2048):
    B, S, H = seq.shape
    F = params["w1"].shape[1]
    assert H % head_num == 0, "hidden_dim must be divisible by head_num"
    hd = H // head_num
    md = jnp.dtype(matmul_dtype)
    ed = jnp.dtype(exp_dtype)

    # ---- one-time parameter layout prep (cache at model-load time) ----------
    inv_scale = 1.0 / math.sqrt(hd)
    wq_s = (params["wq"] * inv_scale).astype(md)   # scale folded into wq/bq
    bq_s = params["bq"] * inv_scale
    wk_m = params["wk"].astype(md)
    wv_m = params["wv"].astype(md)
    wo_m = params["wo"].astype(md)
    bk, bv, bo = params["bk"], params["bv"], params["bo"]
    b1, b2 = params["b1"], params["b2"]
    g1, be1, g2, be2 = params["g1"], params["be1"], params["g2"], params["be2"]

    # FFN F-chunking: weights pre-reshaped so the kernel indexes chunks on the
    # leading dim (no dynamic lane slicing).  Chunk must be a 128 multiple.
    if ff_chunk is None or F <= ff_chunk or F % ff_chunk or ff_chunk % 128:
        ff_chunks, ffc = 1, F
    else:
        ff_chunks, ffc = F // ff_chunk, ff_chunk
    w1c = params["w1"].reshape(H, ff_chunks, ffc).transpose(1, 0, 2).astype(md)
    b1c = b1.reshape(ff_chunks, 1, ffc)
    w2c = params["w2"].reshape(ff_chunks, ffc, H).astype(md)

    # additive mask bias, computed once in the wrapper
    bias = jnp.where(mask == 0, -1000000000.0, 0.0).astype(jnp.float32)

    kernel = functools.partial(
        encoder_kernel, head_num=head_num, ff_chunks=ff_chunks,
        matmul_dtype=md, exp_dtype=ed)

    # generation-aware VMEM budget (raise on 128 MiB chips, headroom on v7x)
    wbytes = sum(int(a.size) * a.dtype.itemsize
                 for a in (wq_s, wk_m, wv_m, wo_m, w1c, w2c))
    abytes = 4 * (8 * S * H + 3 * S * S + 2 * S * ffc)
    cap = max((_vmem_capacity_bytes() * 7) // 8, 32 << 20)
    vmem_limit = int(min(max(2 * wbytes + 2 * abytes + (8 << 20), 32 << 20),
                         cap))

    def const_spec(arr):
        nd = arr.ndim
        return pl.BlockSpec(arr.shape, lambda b, _nd=nd: (0,) * _nd)

    in_specs = [
        pl.BlockSpec((1, S, H), lambda b: (b, 0, 0)),        # seq
        pl.BlockSpec((1, 1, S, S), lambda b: (b, 0, 0, 0)),  # mask bias
        const_spec(wq_s), const_spec(bq_s),
        const_spec(wk_m), const_spec(bk),
        const_spec(wv_m), const_spec(bv),
        const_spec(wo_m), const_spec(bo),
        const_spec(g1), const_spec(be1),
        const_spec(w1c), const_spec(b1c), const_spec(w2c), const_spec(b2),
        const_spec(g2), const_spec(be2),
    ]

    return pl.pallas_call(
        kernel,
        out_shape=jax.ShapeDtypeStruct((B, S, H), jnp.float32),
        grid_spec=pltpu.PrefetchScalarGridSpec(
            num_scalar_prefetch=0,
            grid=(B,),
            in_specs=in_specs,
            out_specs=pl.BlockSpec((1, S, H), lambda b: (b, 0, 0)),
            scratch_shapes=[pltpu.VMEM((S, H), md),   # Q (all heads)
                            pltpu.VMEM((S, H), md),   # K
                            pltpu.VMEM((S, H), md)],  # V
        ),
        compiler_params=pltpu.CompilerParams(
            # batch axis is parallel -> can split across v7x's two TensorCores
            dimension_semantics=("parallel",),
            vmem_limit_bytes=vmem_limit),
    )(seq, bias, wq_s, bq_s, wk_m, bk, wv_m, bv, wo_m, bo,
      g1, be1, w1c, b1c, w2c, b2, g2, be2)


# ---------------- pure-JAX reference (for verification) ----------------------
def reference_encoder(seq, mask, params, *, head_num):
    B, S, H = seq.shape
    hd = H // head_num

    def lin(x, w, b):
        return x @ w + b

    q = lin(seq, params["wq"], params["bq"]).reshape(B, S, head_num, hd).transpose(0, 2, 1, 3)
    k = lin(seq, params["wk"], params["bk"]).reshape(B, S, head_num, hd).transpose(0, 2, 1, 3)
    v = lin(seq, params["wv"], params["bv"]).reshape(B, S, head_num, hd).transpose(0, 2, 1, 3)
    scores = jnp.einsum("bhqd,bhkd->bhqk", q, k) / math.sqrt(hd)
    scores = jnp.where(mask == 0, -1e9, scores)
    attn = jax.nn.softmax(scores, axis=-1)
    ctx = jnp.einsum("bhqk,bhkd->bhqd", attn, v).transpose(0, 2, 1, 3).reshape(B, S, H)
    attn_seq = lin(ctx, params["wo"], params["bo"])

    def ln(x, g, b):
        mu = jnp.mean(x, -1, keepdims=True)
        var = jnp.mean((x - mu) ** 2, -1, keepdims=True)
        return (x - mu) / jnp.sqrt(var + 1e-6) * g + b

    x1 = seq + ln(attn_seq, params["g1"], params["be1"])
    h1 = lin(x1, params["w1"], params["b1"])
    h1 = 0.5 * h1 * (1.0 + lax.erf(h1 / math.sqrt(2.0)))
    ffn = lin(h1, params["w2"], params["b2"])
    return x1 + ln(ffn, params["g2"], params["be2"])


def init_params(key, hidden_dim, ff_dim):
    ks = jax.random.split(key, 8)
    H, F = hidden_dim, ff_dim
    s_h = 1.0 / math.sqrt(H)
    s_f = 1.0 / math.sqrt(F)
    return {
        "wq": jax.random.normal(ks[0], (H, H), jnp.float32) * s_h,
        "bq": jax.random.normal(ks[1], (1, H), jnp.float32) * 0.01,
        "wk": jax.random.normal(ks[2], (H, H), jnp.float32) * s_h,
        "bk": jax.random.normal(ks[3], (1, H), jnp.float32) * 0.01,
        "wv": jax.random.normal(ks[4], (H, H), jnp.float32) * s_h,
        "bv": jax.random.normal(ks[5], (1, H), jnp.float32) * 0.01,
        "wo": jax.random.normal(ks[6], (H, H), jnp.float32) * s_h,
        "bo": jax.random.normal(ks[7], (1, H), jnp.float32) * 0.01,
        "g1": jnp.ones((1, H), jnp.float32),
        "be1": jnp.zeros((1, H), jnp.float32),
        "w1": jax.random.normal(jax.random.PRNGKey(100), (H, F), jnp.float32) * s_h,
        "b1": jnp.zeros((1, F), jnp.float32),
        "w2": jax.random.normal(jax.random.PRNGKey(101), (F, H), jnp.float32) * s_f,
        "b2": jnp.zeros((1, H), jnp.float32),
        "g2": jnp.ones((1, H), jnp.float32),
        "be2": jnp.zeros((1, H), jnp.float32),
    }


if __name__ == "__main__":
    B, S, H, NH, FF = 2, 8, 32, 4, 256

    key = jax.random.PRNGKey(0)
    k_seq, k_par = jax.random.split(key)
    seq = jax.random.normal(k_seq, (B, S, H), jnp.float32)

    # mask: (B, 1, S, S); batch 1 has its last two key positions masked out.
    mask = jnp.ones((B, 1, S, S), jnp.float32)
    mask = mask.at[1, :, :, -2:].set(0.0)

    params = init_params(k_par, H, FF)
    ref = reference_encoder(seq, mask, params, head_num=NH)

    # f32 matmul-operand path; ff_chunk=128 exercises the chunked FFN
    # fori_loop (2 chunks).  Tolerance covers the approximate EUP reciprocal
    # used for the softmax normalization.
    out = transformer_encoder(seq, mask, params, head_num=NH,
                              matmul_dtype=jnp.float32, ff_chunk=128)
    out = jax.block_until_ready(out)
    assert out.shape == (B, S, H)
    assert jnp.allclose(out, ref, rtol=1e-2, atol=1e-2), "f32 kernel mismatch"

    # bf16 MXU-operand path (default; f32 accumulation, f32 softmax/LN/GELU).
    # On v6e/v7x additionally pass exp_dtype=jnp.bfloat16 for the bf16 EUP exp.
    out_bf16 = transformer_encoder(seq, mask, params, head_num=NH,
                                   matmul_dtype=jnp.bfloat16, ff_chunk=128)
    out_bf16 = jax.block_until_ready(out_bf16)
    assert jnp.allclose(out_bf16, ref, rtol=1e-1, atol=1e-1), "bf16 kernel mismatch"

    print("KERNEL_OK")
</pallas_src>

<mosaic_0001>
module attributes {stable_mosaic.version = 11 : i64} {
  func.func @encoder_kernel(%arg0: i32, %arg1: memref<1x8x32xf32, #tpu.memory_space<vmem>>, %arg2: memref<1x1x8x8xf32, #tpu.memory_space<vmem>>, %arg3: memref<32x32xf32, #tpu.memory_space<vmem>>, %arg4: memref<1x32xf32, #tpu.memory_space<vmem>>, %arg5: memref<32x32xf32, #tpu.memory_space<vmem>>, %arg6: memref<1x32xf32, #tpu.memory_space<vmem>>, %arg7: memref<32x32xf32, #tpu.memory_space<vmem>>, %arg8: memref<1x32xf32, #tpu.memory_space<vmem>>, %arg9: memref<32x32xf32, #tpu.memory_space<vmem>>, %arg10: memref<1x32xf32, #tpu.memory_space<vmem>>, %arg11: memref<1x32xf32, #tpu.memory_space<vmem>>, %arg12: memref<1x32xf32, #tpu.memory_space<vmem>>, %arg13: memref<2x32x128xf32, #tpu.memory_space<vmem>>, %arg14: memref<2x1x128xf32, #tpu.memory_space<vmem>>, %arg15: memref<2x128x32xf32, #tpu.memory_space<vmem>>, %arg16: memref<1x32xf32, #tpu.memory_space<vmem>>, %arg17: memref<1x32xf32, #tpu.memory_space<vmem>>, %arg18: memref<1x32xf32, #tpu.memory_space<vmem>>, %arg19: memref<1x8x32xf32, #tpu.memory_space<vmem>>, %arg20: memref<8x32xf32, #tpu.memory_space<vmem>>, %arg21: memref<8x32xf32, #tpu.memory_space<vmem>>, %arg22: memref<8x32xf32, #tpu.memory_space<vmem>>) attributes {dimension_semantics = [#tpu.dimension_semantics<parallel>], iteration_bounds = array<i64: 2>, scalar_prefetch = 0 : i64, scratch_operands = 3 : i64, tpu.core_type = #tpu.core_type<tc>, window_params = [{transform_indices = @transform_0, window_bounds = array<i64: 1, 8, 32>}, {transform_indices = @transform_1, window_bounds = array<i64: 1, 1, 8, 8>}, {pipeline_mode = #tpu.pipeline_mode<synchronous>, transform_indices = @transform_2, window_bounds = array<i64: 32, 32>}, {pipeline_mode = #tpu.pipeline_mode<synchronous>, transform_indices = @transform_3, window_bounds = array<i64: 1, 32>}, {pipeline_mode = #tpu.pipeline_mode<synchronous>, transform_indices = @transform_4, window_bounds = array<i64: 32, 32>}, {pipeline_mode = #tpu.pipeline_mode<synchronous>, transform_indices = @transform_5, window_bounds = array<i64: 1, 32>}, {pipeline_mode = #tpu.pipeline_mode<synchronous>, transform_indices = @transform_6, window_bounds = array<i64: 32, 32>}, {pipeline_mode = #tpu.pipeline_mode<synchronous>, transform_indices = @transform_7, window_bounds = array<i64: 1, 32>}, {pipeline_mode = #tpu.pipeline_mode<synchronous>, transform_indices = @transform_8, window_bounds = array<i64: 32, 32>}, {pipeline_mode = #tpu.pipeline_mode<synchronous>, transform_indices = @transform_9, window_bounds = array<i64: 1, 32>}, {pipeline_mode = #tpu.pipeline_mode<synchronous>, transform_indices = @transform_10, window_bounds = array<i64: 1, 32>}, {pipeline_mode = #tpu.pipeline_mode<synchronous>, transform_indices = @transform_11, window_bounds = array<i64: 1, 32>}, {pipeline_mode = #tpu.pipeline_mode<synchronous>, transform_indices = @transform_12, window_bounds = array<i64: 2, 32, 128>}, {pipeline_mode = #tpu.pipeline_mode<synchronous>, transform_indices = @transform_13, window_bounds = array<i64: 2, 1, 128>}, {pipeline_mode = #tpu.pipeline_mode<synchronous>, transform_indices = @transform_14, window_bounds = array<i64: 2, 128, 32>}, {pipeline_mode = #tpu.pipeline_mode<synchronous>, transform_indices = @transform_15, window_bounds = array<i64: 1, 32>}, {pipeline_mode = #tpu.pipeline_mode<synchronous>, transform_indices = @transform_16, window_bounds = array<i64: 1, 32>}, {pipeline_mode = #tpu.pipeline_mode<synchronous>, transform_indices = @transform_17, window_bounds = array<i64: 1, 32>}, {transform_indices = @transform_18, window_bounds = array<i64: 1, 8, 32>}]} {
    %c0 = arith.constant 0 : index
    %c0_0 = arith.constant 0 : index
    %c0_1 = arith.constant 0 : index
    %0 = vector.load %arg1[%c0, %c0_0, %c0_1] : memref<1x8x32xf32, #tpu.memory_space<vmem>>, vector<1x8x32xf32>
    %1 = vector.shape_cast %0 : vector<1x8x32xf32> to vector<8x32xf32>
    %c0_2 = arith.constant 0 : index
    %c0_3 = arith.constant 0 : index
    %2 = vector.load %arg3[%c0_2, %c0_3] : memref<32x32xf32, #tpu.memory_space<vmem>>, vector<32x32xf32>
    %cst = arith.constant dense<0.000000e+00> : vector<8x32xf32>
    %3 = tpu.matmul %1, %2, %cst {dimension_numbers = #tpu.dot_dimension_numbers<[1], [0], [0], [1], [0, 0, 1, 1], [], []>} : vector<8x32xf32>, vector<32x32xf32>, vector<8x32xf32> -> vector<8x32xf32>
    %c0_4 = arith.constant 0 : index
    %c0_5 = arith.constant 0 : index
    %4 = vector.load %arg4[%c0_4, %c0_5] : memref<1x32xf32, #tpu.memory_space<vmem>>, vector<1x32xf32>
    %5 = vector.broadcast %4 : vector<1x32xf32> to vector<8x32xf32>
    %6 = arith.addf %3, %5 : vector<8x32xf32>
    %c0_6 = arith.constant 0 : index
    %c0_7 = arith.constant 0 : index
    %7 = vector.load %arg20[%c0_6, %c0_7] : memref<8x32xf32, #tpu.memory_space<vmem>>, vector<8x32xf32>
    tpu.vector_store %arg20[%c0_6, %c0_7], %6 {strides = array<i32>} : memref<8x32xf32, #tpu.memory_space<vmem>>, vector<8x32xf32>,
    %c0_8 = arith.constant 0 : index
    %c0_9 = arith.constant 0 : index
    %8 = vector.load %arg5[%c0_8, %c0_9] : memref<32x32xf32, #tpu.memory_space<vmem>>, vector<32x32xf32>
    %cst_10 = arith.constant dense<0.000000e+00> : vector<8x32xf32>
    %9 = tpu.matmul %1, %8, %cst_10 {dimension_numbers = #tpu.dot_dimension_numbers<[1], [0], [0], [1], [0, 0, 1, 1], [], []>} : vector<8x32xf32>, vector<32x32xf32>, vector<8x32xf32> -> vector<8x32xf32>
    %c0_11 = arith.constant 0 : index
    %c0_12 = arith.constant 0 : index
    %10 = vector.load %arg6[%c0_11, %c0_12] : memref<1x32xf32, #tpu.memory_space<vmem>>, vector<1x32xf32>
    %11 = vector.broadcast %10 : vector<1x32xf32> to vector<8x32xf32>
    %12 = arith.addf %9, %11 : vector<8x32xf32>
    %c0_13 = arith.constant 0 : index
    %c0_14 = arith.constant 0 : index
    %13 = vector.load %arg21[%c0_13, %c0_14] : memref<8x32xf32, #tpu.memory_space<vmem>>, vector<8x32xf32>
    tpu.vector_store %arg21[%c0_13, %c0_14], %12 {strides = array<i32>} : memref<8x32xf32, #tpu.memory_space<vmem>>, vector<8x32xf32>,
    %c0_15 = arith.constant 0 : index
    %c0_16 = arith.constant 0 : index
    %14 = vector.load %arg7[%c0_15, %c0_16] : memref<32x32xf32, #tpu.memory_space<vmem>>, vector<32x32xf32>
    %cst_17 = arith.constant dense<0.000000e+00> : vector<8x32xf32>
    %15 = tpu.matmul %1, %14, %cst_17 {dimension_numbers = #tpu.dot_dimension_numbers<[1], [0], [0], [1], [0, 0, 1, 1], [], []>} : vector<8x32xf32>, vector<32x32xf32>, vector<8x32xf32> -> vector<8x32xf32>
    %c0_18 = arith.constant 0 : index
    %c0_19 = arith.constant 0 : index
    %16 = vector.load %arg8[%c0_18, %c0_19] : memref<1x32xf32, #tpu.memory_space<vmem>>, vector<1x32xf32>
    %17 = vector.broadcast %16 : vector<1x32xf32> to vector<8x32xf32>
    %18 = arith.addf %15, %17 : vector<8x32xf32>
    %c0_20 = arith.constant 0 : index
    %c0_21 = arith.constant 0 : index
    %19 = vector.load %arg22[%c0_20, %c0_21] : memref<8x32xf32, #tpu.memory_space<vmem>>, vector<8x32xf32>
    tpu.vector_store %arg22[%c0_20, %c0_21], %18 {strides = array<i32>} : memref<8x32xf32, #tpu.memory_space<vmem>>, vector<8x32xf32>,
    %c0_22 = arith.constant 0 : index
    %c0_23 = arith.constant 0 : index
    %c0_24 = arith.constant 0 : index
    %c0_25 = arith.constant 0 : index
    %20 = vector.load %arg2[%c0_22, %c0_23, %c0_24, %c0_25] : memref<1x1x8x8xf32, #tpu.memory_space<vmem>>, vector<1x1x8x8xf32>
    %21 = vector.shape_cast %20 : vector<1x1x8x8xf32> to vector<8x8xf32>
    %cst_26 = arith.constant 0.000000e+00 : f32
    %22 = vector.broadcast %cst_26 : f32 to vector<8x32xf32>
    %c0_27 = arith.constant 0 : index
    %c0_28 = arith.constant 0 : index
    %23 = vector.load %arg20[%c0_27, %c0_28] : memref<8x32xf32, #tpu.memory_space<vmem>>, vector<8x8xf32>
    %c0_29 = arith.constant 0 : index
    %c0_30 = arith.constant 0 : index
    %24 = vector.load %arg21[%c0_29, %c0_30] : memref<8x32xf32, #tpu.memory_space<vmem>>, vector<8x8xf32>
    %c0_31 = arith.constant 0 : index
    %c0_32 = arith.constant 0 : index
    %25 = vector.load %arg22[%c0_31, %c0_32] : memref<8x32xf32, #tpu.memory_space<vmem>>, vector<8x8xf32>
    "tpu.trace_start"() <{level = 10 : i32, message = "qd,kd->qk"}> : () -> ()
    %cst_33 = arith.constant dense<0.000000e+00> : vector<8x8xf32>
    %26 = tpu.matmul %23, %24, %cst_33 {dimension_numbers = #tpu.dot_dimension_numbers<[1], [1], [0], [0], [0, 0, 1, 0], [], []>} : vector<8x8xf32>, vector<8x8xf32>, vector<8x8xf32> -> vector<8x8xf32>
    "tpu.trace_stop"() : () -> ()
    %27 = arith.addf %26, %21 : vector<8x8xf32>
    %cst_34 = arith.constant dense<0xFF800000> : vector<8xf32>
    %28 = vector.multi_reduction <maximumf>, %27, %cst_34 [1] : vector<8x8xf32> to vector<8xf32>
    %29 = vector.shape_cast %28 : vector<8xf32> to vector<8x1xf32>
    %30 = vector.broadcast %29 : vector<8x1xf32> to vector<8x8xf32>
    %31 = arith.subf %27, %30 : vector<8x8xf32>
    %32 = math.exp %31 : vector<8x8xf32>
    %cst_35 = arith.constant dense<0.000000e+00> : vector<8xf32>
    %33 = vector.multi_reduction <add>, %32, %cst_35 [1] : vector<8x8xf32> to vector<8xf32>
    %34 = vector.shape_cast %33 : vector<8xf32> to vector<8x1xf32>
    "tpu.trace_start"() <{level = 10 : i32, message = "qk,kd->qd"}> : () -> ()
    %cst_36 = arith.constant dense<0.000000e+00> : vector<8x8xf32>
    %35 = tpu.matmul %32, %25, %cst_36 {dimension_numbers = #tpu.dot_dimension_numbers<[1], [0], [0], [1], [0, 0, 1, 1], [], []>} : vector<8x8xf32>, vector<8x8xf32>, vector<8x8xf32> -> vector<8x8xf32>
    "tpu.trace_stop"() : () -> ()
    %36 = tpu.reciprocal %34 {approx = true} : vector<8x1xf32> -> vector<8x1xf32>
    %37 = vector.broadcast %36 : vector<8x1xf32> to vector<8x8xf32>
    %38 = arith.mulf %35, %37 : vector<8x8xf32>
    %c0_37 = arith.constant 0 : index
    %c0_38 = arith.constant 0 : index
    %39 = vector.load %arg9[%c0_37, %c0_38] : memref<32x32xf32, #tpu.memory_space<vmem>>, vector<8x32xf32>
    %cst_39 = arith.constant dense<0.000000e+00> : vector<8x32xf32>
    %40 = tpu.matmul %38, %39, %cst_39 {dimension_numbers = #tpu.dot_dimension_numbers<[1], [0], [0], [1], [0, 0, 1, 1], [], []>} : vector<8x8xf32>, vector<8x32xf32>, vector<8x32xf32> -> vector<8x32xf32>
    %41 = arith.addf %22, %40 : vector<8x32xf32>
    %c0_40 = arith.constant 0 : index
    %c8 = arith.constant 8 : index
    %42 = vector.load %arg20[%c0_40, %c8] : memref<8x32xf32, #tpu.memory_space<vmem>>, vector<8x8xf32>
    %c0_41 = arith.constant 0 : index
    %c8_42 = arith.constant 8 : index
    %43 = vector.load %arg21[%c0_41, %c8_42] : memref<8x32xf32, #tpu.memory_space<vmem>>, vector<8x8xf32>
    %c0_43 = arith.constant 0 : index
    %c8_44 = arith.constant 8 : index
    %44 = vector.load %arg22[%c0_43, %c8_44] : memref<8x32xf32, #tpu.memory_space<vmem>>, vector<8x8xf32>
    "tpu.trace_start"() <{level = 10 : i32, message = "qd,kd->qk"}> : () -> ()
    %cst_45 = arith.constant dense<0.000000e+00> : vector<8x8xf32>
    %45 = tpu.matmul %42, %43, %cst_45 {dimension_numbers = #tpu.dot_dimension_numbers<[1], [1], [0], [0], [0, 0, 1, 0], [], []>} : vector<8x8xf32>, vector<8x8xf32>, vector<8x8xf32> -> vector<8x8xf32>
    "tpu.trace_stop"() : () -> ()
    %46 = arith.addf %45, %21 : vector<8x8xf32>
    %cst_46 = arith.constant dense<0xFF800000> : vector<8xf32>
    %47 = vector.multi_reduction <maximumf>, %46, %cst_46 [1] : vector<8x8xf32> to vector<8xf32>
    %48 = vector.shape_cast %47 : vector<8xf32> to vector<8x1xf32>
    %49 = vector.broadcast %48 : vector<8x1xf32> to vector<8x8xf32>
    %50 = arith.subf %46, %49 : vector<8x8xf32>
    %51 = math.exp %50 : vector<8x8xf32>
    %cst_47 = arith.constant dense<0.000000e+00> : vector<8xf32>
    %52 = vector.multi_reduction <add>, %51, %cst_47 [1] : vector<8x8xf32> to vector<8xf32>
    %53 = vector.shape_cast %52 : vector<8xf32> to vector<8x1xf32>
    "tpu.trace_start"() <{level = 10 : i32, message = "qk,kd->qd"}> : () -> ()
    %cst_48 = arith.constant dense<0.000000e+00> : vector<8x8xf32>
    %54 = tpu.matmul %51, %44, %cst_48 {dimension_numbers = #tpu.dot_dimension_numbers<[1], [0], [0], [1], [0, 0, 1, 1], [], []>} : vector<8x8xf32>, vector<8x8xf32>, vector<8x8xf32> -> vector<8x8xf32>
    "tpu.trace_stop"() : () -> ()
    %55 = tpu.reciprocal %53 {approx = true} : vector<8x1xf32> -> vector<8x1xf32>
    %56 = vector.broadcast %55 : vector<8x1xf32> to vector<8x8xf32>
    %57 = arith.mulf %54, %56 : vector<8x8xf32>
    %c8_49 = arith.constant 8 : index
    %c0_50 = arith.constant 0 : index
    %58 = vector.load %arg9[%c8_49, %c0_50] : memref<32x32xf32, #tpu.memory_space<vmem>>, vector<8x32xf32>
    %cst_51 = arith.constant dense<0.000000e+00> : vector<8x32xf32>
    %59 = tpu.matmul %57, %58, %cst_51 {dimension_numbers = #tpu.dot_dimension_numbers<[1], [0], [0], [1], [0, 0, 1, 1], [], []>} : vector<8x8xf32>, vector<8x32xf32>, vector<8x32xf32> -> vector<8x32xf32>
    %60 = arith.addf %41, %59 : vector<8x32xf32>
    %c0_52 = arith.constant 0 : index
    %c16 = arith.constant 16 : index
    %61 = vector.load %arg20[%c0_52, %c16] : memref<8x32xf32, #tpu.memory_space<vmem>>, vector<8x8xf32>
    %c0_53 = arith.constant 0 : index
    %c16_54 = arith.constant 16 : index
    %62 = vector.load %arg21[%c0_53, %c16_54] : memref<8x32xf32, #tpu.memory_space<vmem>>, vector<8x8xf32>
    %c0_55 = arith.constant 0 : index
    %c16_56 = arith.constant 16 : index
    %63 = vector.load %arg22[%c0_55, %c16_56] : memref<8x32xf32, #tpu.memory_space<vmem>>, vector<8x8xf32>
    "tpu.trace_start"() <{level = 10 : i32, message = "qd,kd->qk"}> : () -> ()
    %cst_57 = arith.constant dense<0.000000e+00> : vector<8x8xf32>
    %64 = tpu.matmul %61, %62, %cst_57 {dimension_numbers = #tpu.dot_dimension_numbers<[1], [1], [0], [0], [0, 0, 1, 0], [], []>} : vector<8x8xf32>, vector<8x8xf32>, vector<8x8xf32> -> vector<8x8xf32>
    "tpu.trace_stop"() : () -> ()
    %65 = arith.addf %64, %21 : vector<8x8xf32>
    %cst_58 = arith.constant dense<0xFF800000> : vector<8xf32>
    %66 = vector.multi_reduction <maximumf>, %65, %cst_58 [1] : vector<8x8xf32> to vector<8xf32>
    %67 = vector.shape_cast %66 : vector<8xf32> to vector<8x1xf32>
    %68 = vector.broadcast %67 : vector<8x1xf32> to vector<8x8xf32>
    %69 = arith.subf %65, %68 : vector<8x8xf32>
    %70 = math.exp %69 : vector<8x8xf32>
    %cst_59 = arith.constant dense<0.000000e+00> : vector<8xf32>
    %71 = vector.multi_reduction <add>, %70, %cst_59 [1] : vector<8x8xf32> to vector<8xf32>
    %72 = vector.shape_cast %71 : vector<8xf32> to vector<8x1xf32>
    "tpu.trace_start"() <{level = 10 : i32, message = "qk,kd->qd"}> : () -> ()
    %cst_60 = arith.constant dense<0.000000e+00> : vector<8x8xf32>
    %73 = tpu.matmul %70, %63, %cst_60 {dimension_numbers = #tpu.dot_dimension_numbers<[1], [0], [0], [1], [0, 0, 1, 1], [], []>} : vector<8x8xf32>, vector<8x8xf32>, vector<8x8xf32> -> vector<8x8xf32>
    "tpu.trace_stop"() : () -> ()
    %74 = tpu.reciprocal %72 {approx = true} : vector<8x1xf32> -> vector<8x1xf32>
    %75 = vector.broadcast %74 : vector<8x1xf32> to vector<8x8xf32>
    %76 = arith.mulf %73, %75 : vector<8x8xf32>
    %c16_61 = arith.constant 16 : index
    %c0_62 = arith.constant 0 : index
    %77 = vector.load %arg9[%c16_61, %c0_62] : memref<32x32xf32, #tpu.memory_space<vmem>>, vector<8x32xf32>
    %cst_63 = arith.constant dense<0.000000e+00> : vector<8x32xf32>
    %78 = tpu.matmul %76, %77, %cst_63 {dimension_numbers = #tpu.dot_dimension_numbers<[1], [0], [0], [1], [0, 0, 1, 1], [], []>} : vector<8x8xf32>, vector<8x32xf32>, vector<8x32xf32> -> vector<8x32xf32>
    %79 = arith.addf %60, %78 : vector<8x32xf32>
    %c0_64 = arith.constant 0 : index
    %c24 = arith.constant 24 : index
    %80 = vector.load %arg20[%c0_64, %c24] : memref<8x32xf32, #tpu.memory_space<vmem>>, vector<8x8xf32>
    %c0_65 = arith.constant 0 : index
    %c24_66 = arith.constant 24 : index
    %81 = vector.load %arg21[%c0_65, %c24_66] : memref<8x32xf32, #tpu.memory_space<vmem>>, vector<8x8xf32>
    %c0_67 = arith.constant 0 : index
    %c24_68 = arith.constant 24 : index
    %82 = vector.load %arg22[%c0_67, %c24_68] : memref<8x32xf32, #tpu.memory_space<vmem>>, vector<8x8xf32>
    "tpu.trace_start"() <{level = 10 : i32, message = "qd,kd->qk"}> : () -> ()
    %cst_69 = arith.constant dense<0.000000e+00> : vector<8x8xf32>
    %83 = tpu.matmul %80, %81, %cst_69 {dimension_numbers = #tpu.dot_dimension_numbers<[1], [1], [0], [0], [0, 0, 1, 0], [], []>} : vector<8x8xf32>, vector<8x8xf32>, vector<8x8xf32> -> vector<8x8xf32>
    "tpu.trace_stop"() : () -> ()
    %84 = arith.addf %83, %21 : vector<8x8xf32>
    %cst_70 = arith.constant dense<0xFF800000> : vector<8xf32>
    %85 = vector.multi_reduction <maximumf>, %84, %cst_70 [1] : vector<8x8xf32> to vector<8xf32>
    %86 = vector.shape_cast %85 : vector<8xf32> to vector<8x1xf32>
    %87 = vector.broadcast %86 : vector<8x1xf32> to vector<8x8xf32>
    %88 = arith.subf %84, %87 : vector<8x8xf32>
    %89 = math.exp %88 : vector<8x8xf32>
    %cst_71 = arith.constant dense<0.000000e+00> : vector<8xf32>
    %90 = vector.multi_reduction <add>, %89, %cst_71 [1] : vector<8x8xf32> to vector<8xf32>
    %91 = vector.shape_cast %90 : vector<8xf32> to vector<8x1xf32>
    "tpu.trace_start"() <{level = 10 : i32, message = "qk,kd->qd"}> : () -> ()
    %cst_72 = arith.constant dense<0.000000e+00> : vector<8x8xf32>
    %92 = tpu.matmul %89, %82, %cst_72 {dimension_numbers = #tpu.dot_dimension_numbers<[1], [0], [0], [1], [0, 0, 1, 1], [], []>} : vector<8x8xf32>, vector<8x8xf32>, vector<8x8xf32> -> vector<8x8xf32>
    "tpu.trace_stop"() : () -> ()
    %93 = tpu.reciprocal %91 {approx = true} : vector<8x1xf32> -> vector<8x1xf32>
    %94 = vector.broadcast %93 : vector<8x1xf32> to vector<8x8xf32>
    %95 = arith.mulf %92, %94 : vector<8x8xf32>
    %c24_73 = arith.constant 24 : index
    %c0_74 = arith.constant 0 : index
    %96 = vector.load %arg9[%c24_73, %c0_74] : memref<32x32xf32, #tpu.memory_space<vmem>>, vector<8x32xf32>
    %cst_75 = arith.constant dense<0.000000e+00> : vector<8x32xf32>
    %97 = tpu.matmul %95, %96, %cst_75 {dimension_numbers = #tpu.dot_dimension_numbers<[1], [0], [0], [1], [0, 0, 1, 1], [], []>} : vector<8x8xf32>, vector<8x32xf32>, vector<8x32xf32> -> vector<8x32xf32>
    %98 = arith.addf %79, %97 : vector<8x32xf32>
    %c0_76 = arith.constant 0 : index
    %c0_77 = arith.constant 0 : index
    %99 = vector.load %arg10[%c0_76, %c0_77] : memref<1x32xf32, #tpu.memory_space<vmem>>, vector<1x32xf32>
    %100 = vector.broadcast %99 : vector<1x32xf32> to vector<8x32xf32>
    %101 = arith.addf %98, %100 : vector<8x32xf32>
    %c0_78 = arith.constant 0 : index
    %c0_79 = arith.constant 0 : index
    %102 = vector.load %arg11[%c0_78, %c0_79] : memref<1x32xf32, #tpu.memory_space<vmem>>, vector<1x32xf32>
    %c0_80 = arith.constant 0 : index
    %c0_81 = arith.constant 0 : index
    %103 = vector.load %arg12[%c0_80, %c0_81] : memref<1x32xf32, #tpu.memory_space<vmem>>, vector<1x32xf32>
    %cst_82 = arith.constant dense<0.000000e+00> : vector<8xf32>
    %104 = vector.multi_reduction <add>, %101, %cst_82 [1] : vector<8x32xf32> to vector<8xf32>
    %105 = vector.shape_cast %104 : vector<8xf32> to vector<8x1xf32>
    %cst_83 = arith.constant 3.200000e+01 : f32
    %106 = vector.broadcast %cst_83 : f32 to vector<8x1xf32>
    %107 = arith.divf %105, %106 : vector<8x1xf32>
    %108 = vector.broadcast %107 : vector<8x1xf32> to vector<8x32xf32>
    %109 = arith.subf %101, %108 : vector<8x32xf32>
    %110 = arith.mulf %109, %109 : vector<8x32xf32>
    %cst_84 = arith.constant dense<0.000000e+00> : vector<8xf32>
    %111 = vector.multi_reduction <add>, %110, %cst_84 [1] : vector<8x32xf32> to vector<8xf32>
    %112 = vector.shape_cast %111 : vector<8xf32> to vector<8x1xf32>
    %cst_85 = arith.constant 3.200000e+01 : f32
    %113 = vector.broadcast %cst_85 : f32 to vector<8x1xf32>
    %114 = arith.divf %112, %113 : vector<8x1xf32>
    %115 = vector.broadcast %107 : vector<8x1xf32> to vector<8x32xf32>
    %116 = arith.subf %101, %115 : vector<8x32xf32>
    %cst_86 = arith.constant 9.99999997E-7 : f32
    %117 = vector.broadcast %cst_86 : f32 to vector<8x1xf32>
    %118 = arith.addf %114, %117 : vector<8x1xf32>
    %119 = math.rsqrt %118 : vector<8x1xf32>
    %120 = vector.broadcast %119 : vector<8x1xf32> to vector<8x32xf32>
    %121 = arith.mulf %116, %120 : vector<8x32xf32>
    %122 = vector.broadcast %102 : vector<1x32xf32> to vector<8x32xf32>
    %123 = arith.mulf %121, %122 : vector<8x32xf32>
    %124 = vector.broadcast %103 : vector<1x32xf32> to vector<8x32xf32>
    %125 = arith.addf %123, %124 : vector<8x32xf32>
    %126 = arith.addf %1, %125 : vector<8x32xf32>
    %cst_87 = arith.constant 0.000000e+00 : f32
    %127 = vector.broadcast %cst_87 : f32 to vector<8x32xf32>
    %c0_i32 = arith.constant 0 : i32
    %128 = arith.index_cast %c0_i32 : i32 to index
    %c0_88 = arith.constant 0 : index
    %c0_89 = arith.constant 0 : index
    %129 = vector.load %arg13[%128, %c0_88, %c0_89] : memref<2x32x128xf32, #tpu.memory_space<vmem>>, vector<1x32x128xf32>
    %130 = vector.shape_cast %129 : vector<1x32x128xf32> to vector<32x128xf32>
    %cst_90 = arith.constant dense<0.000000e+00> : vector<8x128xf32>
    %131 = tpu.matmul %126, %130, %cst_90 {dimension_numbers = #tpu.dot_dimension_numbers<[1], [0], [0], [1], [0, 0, 1, 1], [], []>} : vector<8x32xf32>, vector<32x128xf32>, vector<8x128xf32> -> vector<8x128xf32>
    %132 = arith.index_cast %c0_i32 : i32 to index
    %c0_91 = arith.constant 0 : index
    %c0_92 = arith.constant 0 : index
    %133 = vector.load %arg14[%132, %c0_91, %c0_92] : memref<2x1x128xf32, #tpu.memory_space<vmem>>, vector<1x1x128xf32>
    %134 = vector.shape_cast %133 : vector<1x1x128xf32> to vector<1x128xf32>
    %135 = vector.broadcast %134 : vector<1x128xf32> to vector<8x128xf32>
    %136 = arith.addf %131, %135 : vector<8x128xf32>
    %cst_93 = arith.constant 5.000000e-01 : f32
    %137 = vector.broadcast %cst_93 : f32 to vector<8x128xf32>
    %138 = arith.mulf %137, %136 : vector<8x128xf32>
    %cst_94 = arith.constant 1.41421354 : f32
    %139 = vector.broadcast %cst_94 : f32 to vector<8x128xf32>
    %140 = arith.divf %136, %139 : vector<8x128xf32>
    %141 = math.erf %140 : vector<8x128xf32>
    %cst_95 = arith.constant 1.000000e+00 : f32
    %142 = vector.broadcast %cst_95 : f32 to vector<8x128xf32>
    %143 = arith.addf %142, %141 : vector<8x128xf32>
    %144 = arith.mulf %138, %143 : vector<8x128xf32>
    %145 = arith.index_cast %c0_i32 : i32 to index
    %c0_96 = arith.constant 0 : index
    %c0_97 = arith.constant 0 : index
    %146 = vector.load %arg15[%145, %c0_96, %c0_97] : memref<2x128x32xf32, #tpu.memory_space<vmem>>, vector<1x128x32xf32>
    %147 = vector.shape_cast %146 : vector<1x128x32xf32> to vector<128x32xf32>
    %cst_98 = arith.constant dense<0.000000e+00> : vector<8x32xf32>
    %148 = tpu.matmul %144, %147, %cst_98 {dimension_numbers = #tpu.dot_dimension_numbers<[1], [0], [0], [1], [0, 0, 1, 1], [], []>} : vector<8x128xf32>, vector<128x32xf32>, vector<8x32xf32> -> vector<8x32xf32>
    %149 = arith.addf %127, %148 : vector<8x32xf32>
    %c1_i32 = arith.constant 1 : i32
    %150 = arith.index_cast %c1_i32 : i32 to index
    %c0_99 = arith.constant 0 : index
    %c0_100 = arith.constant 0 : index
    %151 = vector.load %arg13[%150, %c0_99, %c0_100] : memref<2x32x128xf32, #tpu.memory_space<vmem>>, vector<1x32x128xf32>
    %152 = vector.shape_cast %151 : vector<1x32x128xf32> to vector<32x128xf32>
    %cst_101 = arith.constant dense<0.000000e+00> : vector<8x128xf32>
    %153 = tpu.matmul %126, %152, %cst_101 {dimension_numbers = #tpu.dot_dimension_numbers<[1], [0], [0], [1], [0, 0, 1, 1], [], []>} : vector<8x32xf32>, vector<32x128xf32>, vector<8x128xf32> -> vector<8x128xf32>
    %154 = arith.index_cast %c1_i32 : i32 to index
    %c0_102 = arith.constant 0 : index
    %c0_103 = arith.constant 0 : index
    %155 = vector.load %arg14[%154, %c0_102, %c0_103] : memref<2x1x128xf32, #tpu.memory_space<vmem>>, vector<1x1x128xf32>
    %156 = vector.shape_cast %155 : vector<1x1x128xf32> to vector<1x128xf32>
    %157 = vector.broadcast %156 : vector<1x128xf32> to vector<8x128xf32>
    %158 = arith.addf %153, %157 : vector<8x128xf32>
    %cst_104 = arith.constant 5.000000e-01 : f32
    %159 = vector.broadcast %cst_104 : f32 to vector<8x128xf32>
    %160 = arith.mulf %159, %158 : vector<8x128xf32>
    %cst_105 = arith.constant 1.41421354 : f32
    %161 = vector.broadcast %cst_105 : f32 to vector<8x128xf32>
    %162 = arith.divf %158, %161 : vector<8x128xf32>
    %163 = math.erf %162 : vector<8x128xf32>
    %cst_106 = arith.constant 1.000000e+00 : f32
    %164 = vector.broadcast %cst_106 : f32 to vector<8x128xf32>
    %165 = arith.addf %164, %163 : vector<8x128xf32>
    %166 = arith.mulf %160, %165 : vector<8x128xf32>
    %167 = arith.index_cast %c1_i32 : i32 to index
    %c0_107 = arith.constant 0 : index
    %c0_108 = arith.constant 0 : index
    %168 = vector.load %arg15[%167, %c0_107, %c0_108] : memref<2x128x32xf32, #tpu.memory_space<vmem>>, vector<1x128x32xf32>
    %169 = vector.shape_cast %168 : vector<1x128x32xf32> to vector<128x32xf32>
    %cst_109 = arith.constant dense<0.000000e+00> : vector<8x32xf32>
    %170 = tpu.matmul %166, %169, %cst_109 {dimension_numbers = #tpu.dot_dimension_numbers<[1], [0], [0], [1], [0, 0, 1, 1], [], []>} : vector<8x128xf32>, vector<128x32xf32>, vector<8x32xf32> -> vector<8x32xf32>
    %171 = arith.addf %149, %170 : vector<8x32xf32>
    %c2_i32 = arith.constant 2 : i32
    %c0_110 = arith.constant 0 : index
    %c0_111 = arith.constant 0 : index
    %172 = vector.load %arg16[%c0_110, %c0_111] : memref<1x32xf32, #tpu.memory_space<vmem>>, vector<1x32xf32>
    %173 = vector.broadcast %172 : vector<1x32xf32> to vector<8x32xf32>
    %174 = arith.addf %171, %173 : vector<8x32xf32>
    %c0_112 = arith.constant 0 : index
    %c0_113 = arith.constant 0 : index
    %175 = vector.load %arg17[%c0_112, %c0_113] : memref<1x32xf32, #tpu.memory_space<vmem>>, vector<1x32xf32>
    %c0_114 = arith.constant 0 : index
    %c0_115 = arith.constant 0 : index
    %176 = vector.load %arg18[%c0_114, %c0_115] : memref<1x32xf32, #tpu.memory_space<vmem>>, vector<1x32xf32>
    %cst_116 = arith.constant dense<0.000000e+00> : vector<8xf32>
    %177 = vector.multi_reduction <add>, %174, %cst_116 [1] : vector<8x32xf32> to vector<8xf32>
    %178 = vector.shape_cast %177 : vector<8xf32> to vector<8x1xf32>
    %cst_117 = arith.constant 3.200000e+01 : f32
    %179 = vector.broadcast %cst_117 : f32 to vector<8x1xf32>
    %180 = arith.divf %178, %179 : vector<8x1xf32>
    %181 = vector.broadcast %180 : vector<8x1xf32> to vector<8x32xf32>
    %182 = arith.subf %174, %181 : vector<8x32xf32>
    %183 = arith.mulf %182, %182 : vector<8x32xf32>
    %cst_118 = arith.constant dense<0.000000e+00> : vector<8xf32>
    %184 = vector.multi_reduction <add>, %183, %cst_118 [1] : vector<8x32xf32> to vector<8xf32>
    %185 = vector.shape_cast %184 : vector<8xf32> to vector<8x1xf32>
    %cst_119 = arith.constant 3.200000e+01 : f32
    %186 = vector.broadcast %cst_119 : f32 to vector<8x1xf32>
    %187 = arith.divf %185, %186 : vector<8x1xf32>
    %188 = vector.broadcast %180 : vector<8x1xf32> to vector<8x32xf32>
    %189 = arith.subf %174, %188 : vector<8x32xf32>
    %cst_120 = arith.constant 9.99999997E-7 : f32
    %190 = vector.broadcast %cst_120 : f32 to vector<8x1xf32>
    %191 = arith.addf %187, %190 : vector<8x1xf32>
    %192 = math.rsqrt %191 : vector<8x1xf32>
    %193 = vector.broadcast %192 : vector<8x1xf32> to vector<8x32xf32>
    %194 = arith.mulf %189, %193 : vector<8x32xf32>
    %195 = vector.broadcast %175 : vector<1x32xf32> to vector<8x32xf32>
    %196 = arith.mulf %194, %195 : vector<8x32xf32>
    %197 = vector.broadcast %176 : vector<1x32xf32> to vector<8x32xf32>
    %198 = arith.addf %196, %197 : vector<8x32xf32>
    %199 = arith.addf %126, %198 : vector<8x32xf32>
    %c0_121 = arith.constant 0 : index
    %c0_122 = arith.constant 0 : index
    %c0_123 = arith.constant 0 : index
    %200 = vector.load %arg19[%c0_121, %c0_122, %c0_123] : memref<1x8x32xf32, #tpu.memory_space<vmem>>, vector<1x8x32xf32>
    %201 = vector.shape_cast %200 : vector<1x8x32xf32> to vector<8x32xf32>
    %202 = vector.shape_cast %199 : vector<8x32xf32> to vector<1x8x32xf32>
    tpu.vector_store %arg19[%c0_121, %c0_122, %c0_123], %202 {strides = array<i32>} : memref<1x8x32xf32, #tpu.memory_space<vmem>>, vector<1x8x32xf32>,
    return
  }
  func.func @transform_0(%arg0: i32) -> (i32, i32, i32) {
    %c0_i32 = arith.constant 0 : i32
    %c0_i32_0 = arith.constant 0 : i32
    %c0_i32_1 = arith.constant 0 : i32
    return %arg0, %c0_i32, %c0_i32_0 : i32, i32, i32
  }
  func.func @transform_1(%arg0: i32) -> (i32, i32, i32, i32) {
    %c0_i32 = arith.constant 0 : i32
    %c0_i32_0 = arith.constant 0 : i32
    %c0_i32_1 = arith.constant 0 : i32
    %c0_i32_2 = arith.constant 0 : i32
    return %arg0, %c0_i32, %c0_i32_0, %c0_i32_1 : i32, i32, i32, i32
  }
  func.func @transform_2(%arg0: i32) -> (i32, i32) {
    %c0_i32 = arith.constant 0 : i32
    %c0_i32_0 = arith.constant 0 : i32
    %c0_i32_1 = arith.constant 0 : i32
    return %c0_i32, %c0_i32_0 : i32, i32
  }
  func.func @transform_3(%arg0: i32) -> (i32, i32) {
    %c0_i32 = arith.constant 0 : i32
    %c0_i32_0 = arith.constant 0 : i32
    %c0_i32_1 = arith.constant 0 : i32
    return %c0_i32, %c0_i32_0 : i32, i32
  }
  func.func @transform_4(%arg0: i32) -> (i32, i32) {
    %c0_i32 = arith.constant 0 : i32
    %c0_i32_0 = arith.constant 0 : i32
    %c0_i32_1 = arith.constant 0 : i32
    return %c0_i32, %c0_i32_0 : i32, i32
  }
  func.func @transform_5(%arg0: i32) -> (i32, i32) {
    %c0_i32 = arith.constant 0 : i32
    %c0_i32_0 = arith.constant 0 : i32
    %c0_i32_1 = arith.constant 0 : i32
    return %c0_i32, %c0_i32_0 : i32, i32
  }
  func.func @transform_6(%arg0: i32) -> (i32, i32) {
    %c0_i32 = arith.constant 0 : i32
    %c0_i32_0 = arith.constant 0 : i32
    %c0_i32_1 = arith.constant 0 : i32
    return %c0_i32, %c0_i32_0 : i32, i32
  }
  func.func @transform_7(%arg0: i32) -> (i32, i32) {
    %c0_i32 = arith.constant 0 : i32
    %c0_i32_0 = arith.constant 0 : i32
    %c0_i32_1 = arith.constant 0 : i32
    return %c0_i32, %c0_i32_0 : i32, i32
  }
  func.func @transform_8(%arg0: i32) -> (i32, i32) {
    %c0_i32 = arith.constant 0 : i32
    %c0_i32_0 = arith.constant 0 : i32
    %c0_i32_1 = arith.constant 0 : i32
    return %c0_i32, %c0_i32_0 : i32, i32
  }
  func.func @transform_9(%arg0: i32) -> (i32, i32) {
    %c0_i32 = arith.constant 0 : i32
    %c0_i32_0 = arith.constant 0 : i32
    %c0_i32_1 = arith.constant 0 : i32
    return %c0_i32, %c0_i32_0 : i32, i32
  }
  func.func @transform_10(%arg0: i32) -> (i32, i32) {
    %c0_i32 = arith.constant 0 : i32
    %c0_i32_0 = arith.constant 0 : i32
    %c0_i32_1 = arith.constant 0 : i32
    return %c0_i32, %c0_i32_0 : i32, i32
  }
  func.func @transform_11(%arg0: i32) -> (i32, i32) {
    %c0_i32 = arith.constant 0 : i32
    %c0_i32_0 = arith.constant 0 : i32
    %c0_i32_1 = arith.constant 0 : i32
    return %c0_i32, %c0_i32_0 : i32, i32
  }
  func.func @transform_12(%arg0: i32) -> (i32, i32, i32) {
    %c0_i32 = arith.constant 0 : i32
    %c0_i32_0 = arith.constant 0 : i32
    %c0_i32_1 = arith.constant 0 : i32
    %c0_i32_2 = arith.constant 0 : i32
    return %c0_i32, %c0_i32_0, %c0_i32_1 : i32, i32, i32
  }
  func.func @transform_13(%arg0: i32) -> (i32, i32, i32) {
    %c0_i32 = arith.constant 0 : i32
    %c0_i32_0 = arith.constant 0 : i32
    %c0_i32_1 = arith.constant 0 : i32
    %c0_i32_2 = arith.constant 0 : i32
    return %c0_i32, %c0_i32_0, %c0_i32_1 : i32, i32, i32
  }
  func.func @transform_14(%arg0: i32) -> (i32, i32, i32) {
    %c0_i32 = arith.constant 0 : i32
    %c0_i32_0 = arith.constant 0 : i32
    %c0_i32_1 = arith.constant 0 : i32
    %c0_i32_2 = arith.constant 0 : i32
    return %c0_i32, %c0_i32_0, %c0_i32_1 : i32, i32, i32
  }
  func.func @transform_15(%arg0: i32) -> (i32, i32) {
    %c0_i32 = arith.constant 0 : i32
    %c0_i32_0 = arith.constant 0 : i32
    %c0_i32_1 = arith.constant 0 : i32
    return %c0_i32, %c0_i32_0 : i32, i32
  }
  func.func @transform_16(%arg0: i32) -> (i32, i32) {
    %c0_i32 = arith.constant 0 : i32
    %c0_i32_0 = arith.constant 0 : i32
    %c0_i32_1 = arith.constant 0 : i32
    return %c0_i32, %c0_i32_0 : i32, i32
  }
  func.func @transform_17(%arg0: i32) -> (i32, i32) {
    %c0_i32 = arith.constant 0 : i32
    %c0_i32_0 = arith.constant 0 : i32
    %c0_i32_1 = arith.constant 0 : i32
    return %c0_i32, %c0_i32_0 : i32, i32
  }
  func.func @transform_18(%arg0: i32) -> (i32, i32, i32) {
    %c0_i32 = arith.constant 0 : i32
    %c0_i32_0 = arith.constant 0 : i32
    %c0_i32_1 = arith.constant 0 : i32
    return %arg0, %c0_i32, %c0_i32_0 : i32, i32, i32
  }
}

</mosaic_0001>

<llo_original>
// kernel: tpu_custom_call.1
$region0: #{tpu_custom_call.1}
  #allocation0 [shape = 'u32[]', space=smem, size = 0x4, offset = 0x4, fixed_abs, tag = 'smem constant byte address 0x4 - core index']
  #allocation1 [shape = 'u32[144,128]{1,0:T(1,128)}', space=vmem, size = 0x12000, scoped, tag = 'internal scratch']
  #allocation2 [shape = 'f32[8,32]{1,0:T(8,128)}', space=vmem, size = 0x1000, scoped, tag = 'scratch operand']
  #allocation3 [shape = 'f32[8,32]{1,0:T(8,128)}', space=vmem, size = 0x1000, scoped, tag = 'scratch operand']
  #allocation4 [shape = 'f32[8,32]{1,0:T(8,128)}', space=vmem, size = 0x1000, scoped, tag = 'scratch operand']
  %s0 = inlined_call_operand.vmem [shape: f32[2,8,32], index: 0, kind: input, shape index: {}]
  %s1 = inlined_call_operand.vmem [shape: f32[2,1,8,8], index: 1, kind: input, shape index: {}]
  %s2 = inlined_call_operand.vmem [shape: f32[32,32], index: 2, kind: input, shape index: {}]
  %s3 = inlined_call_operand.vmem [shape: f32[1,32], index: 3, kind: input, shape index: {}]
  %s4 = inlined_call_operand.vmem [shape: f32[32,32], index: 4, kind: input, shape index: {}]
  %s5 = inlined_call_operand.vmem [shape: f32[1,32], index: 5, kind: input, shape index: {}]
  %s6 = inlined_call_operand.vmem [shape: f32[32,32], index: 6, kind: input, shape index: {}]
  %s7 = inlined_call_operand.vmem [shape: f32[1,32], index: 7, kind: input, shape index: {}]
  %s8 = inlined_call_operand.vmem [shape: f32[32,32], index: 8, kind: input, shape index: {}]
  %s9 = inlined_call_operand.vmem [shape: f32[1,32], index: 9, kind: input, shape index: {}]
  %s10 = inlined_call_operand.vmem [shape: f32[1,32], index: 10, kind: input, shape index: {}]
  %s11 = inlined_call_operand.vmem [shape: f32[1,32], index: 11, kind: input, shape index: {}]
  %s12 = inlined_call_operand.vmem [shape: f32[2,32,128], index: 12, kind: input, shape index: {}]
  %s13 = inlined_call_operand.vmem [shape: f32[2,1,128], index: 13, kind: input, shape index: {}]
  %s14 = inlined_call_operand.vmem [shape: f32[2,128,32], index: 14, kind: input, shape index: {}]
  %s15 = inlined_call_operand.vmem [shape: f32[1,32], index: 15, kind: input, shape index: {}]
  %s16 = inlined_call_operand.vmem [shape: f32[1,32], index: 16, kind: input, shape index: {}]
  %s17 = inlined_call_operand.vmem [shape: f32[1,32], index: 17, kind: input, shape index: {}]
  %s18 = inlined_call_operand.hbm [shape: f32[2,8,32], index: 18, kind: output, shape index: {}]
  %s19 = sld [smem:[#allocation0]]
  $region105: #{tpu_custom_call.1} parent=0
    _
  %s21 = ssub.s32 1, %s19
  %s22 = scalar_select 0, %s21, %s19
  $region1: #{tpu_custom_call.1} parent=0
    #allocation5 [shape = 'u8[8192]{0}', space=vmem, size = 0x2000, scoped, tag = 'output window, operand 0']
    #allocation6 [shape = 's32[2]{0}', space=sflag, size = 0x8, scoped, tag = 'scoped memory for tpu_custom_call.1']
    %23 = vsyncpa [#allocation6], 0
    %s24 = scalar_lea.sflag [#allocation6], 1
    %25 = vsyncpa %s24, 0
    loop: start=0, step=1, limit=4
    $region2: #{tpu_custom_call.1} parent=1 // loop_pre_header
      _
    $region3: #{tpu_custom_call.1} parent=1 // loop_header
      %s27 = sphi 0, %s31
      %p28 = scmp.ge.s32.totalorder %s27, 4
      %s37 = sphi 0, %s39
      %s40 = sphi 0, %s37
      %s41 = sphi 0, %s40
      %s57 = sphi 0, %s41
      %s63 = sphi 0, %s65
      %s66 = sphi 0, %s63
      %s67 = sphi 0, %s66
      %s83 = sphi 0, %s67
      %s87 = sphi 0, %s87
      %s89 = sphi 0, %s87
      %s90 = sphi 0, %s89
      %s104 = sphi 0, %s90
      %s108 = sphi 0, %s108
      %s110 = sphi 0, %s108
      %s111 = sphi 0, %s110
      %s125 = sphi 0, %s111
      %s129 = sphi 0, %s129
      %s131 = sphi 0, %s129
      %s132 = sphi 0, %s131
      %s146 = sphi 0, %s132
      %s150 = sphi 0, %s150
      %s152 = sphi 0, %s150
      %s153 = sphi 0, %s152
      %s167 = sphi 0, %s153
      %s171 = sphi 0, %s171
      %s173 = sphi 0, %s171
      %s174 = sphi 0, %s173
      %s188 = sphi 0, %s174
      %s192 = sphi 0, %s192
      %s194 = sphi 0, %s192
      %s195 = sphi 0, %s194
      %s209 = sphi 0, %s195
      %s213 = sphi 0, %s213
      %s215 = sphi 0, %s213
      %s216 = sphi 0, %s215
      %s230 = sphi 0, %s216
      %s234 = sphi 0, %s234
      %s236 = sphi 0, %s234
      %s237 = sphi 0, %s236
      %s251 = sphi 0, %s237
      %s255 = sphi 0, %s255
      %s257 = sphi 0, %s255
      %s258 = sphi 0, %s257
      %s272 = sphi 0, %s258
      %s276 = sphi 0, %s276
      %s278 = sphi 0, %s276
      %s279 = sphi 0, %s278
      %s293 = sphi 0, %s279
      %s297 = sphi 0, %s297
      %s299 = sphi 0, %s297
      %s300 = sphi 0, %s299
      %s314 = sphi 0, %s300
      %s318 = sphi 0, %s318
      %s320 = sphi 0, %s318
      %s321 = sphi 0, %s320
      %s335 = sphi 0, %s321
      %s339 = sphi 0, %s339
      %s341 = sphi 0, %s339
      %s342 = sphi 0, %s341
      %s356 = sphi 0, %s342
      %s360 = sphi 0, %s360
      %s362 = sphi 0, %s360
      %s363 = sphi 0, %s362
      %s377 = sphi 0, %s363
      %s381 = sphi 0, %s381
      %s383 = sphi 0, %s381
      %s384 = sphi 0, %s383
      %s398 = sphi 0, %s384
      %s402 = sphi 0, %s402
      %s404 = sphi 0, %s402
      %s405 = sphi 0, %s404
      %s419 = sphi 0, %s405
      %s425 = sphi 0, %s427
      %s428 = sphi 0, %s425
      %s429 = sphi 0, %s428
      %s445 = sphi 0, %s429
    $region4: #{tpu_custom_call.1} parent=1 // loop_header_branch
      %30 = sbr.rel (%p28) target = $region8
    $region5: #{tpu_custom_call.1} parent=1 // loop_body
      %s32 = ssub.s32 %s27, 1
      %s33 = ssub.s32 %s27, 2
      %s34 = sadd.s32 %s27, 1
      %s35 = ssub.s32 %s27, %s34
      %p36 = scmp.eq.s32.totalorder %s35, 0
      %s38 = sadd.s32 %s37, 1
      %s39 = scalar_select %p36, %s37, %s38
      %p42 = pneg %p36
      %p43 = scmp.eq.s32.totalorder %s27, 1
      %p44 = por %p42, %p43
      %p45 = scmp.ne.s32.totalorder %s37, %s40
      %p46 = scmp.eq.s32.totalorder %s27, 0
      %p47 = por %p45, %p46
      %p48 = scmp.ne.s32.totalorder %s37, %s40
      %p49 = scmp.eq.s32.totalorder %s32, 1
      %p50 = por %p48, %p49
      %p51 = scmp.ne.s32.totalorder %s40, %s41
      %p52 = scmp.eq.s32.totalorder %s32, 0
      %p53 = por %p51, %p52
      %p54 = scmp.ne.s32.totalorder %s40, %s41
      %p55 = scmp.eq.s32.totalorder %s33, 1
      %p56 = por %p54, %p55
      %p58 = scmp.ne.s32.totalorder %s41, %s57
      %p59 = scmp.eq.s32.totalorder %s33, 0
      %p60 = por %p58, %p59
      %s61 = ssub.s32 %s27, %s34
      %p62 = scmp.eq.s32.totalorder %s61, 0
      %s64 = sadd.s32 %s63, 1
      %s65 = scalar_select %p62, %s63, %s64
      %p68 = pneg %p62
      %p69 = scmp.eq.s32.totalorder %s27, 1
      %p70 = por %p68, %p69
      %p71 = scmp.ne.s32.totalorder %s63, %s66
      %p72 = scmp.eq.s32.totalorder %s27, 0
      %p73 = por %p71, %p72
      %p74 = scmp.ne.s32.totalorder %s63, %s66
      %p75 = scmp.eq.s32.totalorder %s32, 1
      %p76 = por %p74, %p75
      %p77 = scmp.ne.s32.totalorder %s66, %s67
      %p78 = scmp.eq.s32.totalorder %s32, 0
      %p79 = por %p77, %p78
      %p80 = scmp.ne.s32.totalorder %s66, %s67
      %p81 = scmp.eq.s32.totalorder %s33, 1
      %p82 = por %p80, %p81
      %p84 = scmp.ne.s32.totalorder %s67, %s83
      %p85 = scmp.eq.s32.totalorder %s33, 0
      %p86 = por %p84, %p85
      %s88 = sadd.s32 %s87, 1
      %p91 = scmp.eq.s32.totalorder %s27, 1
      %p92 = scmp.ne.s32.totalorder %s87, %s89
      %p93 = scmp.eq.s32.totalorder %s27, 0
      %p94 = por %p92, %p93
      %p95 = scmp.ne.s32.totalorder %s87, %s89
      %p96 = scmp.eq.s32.totalorder %s32, 1
      %p97 = por %p95, %p96
      %p98 = scmp.ne.s32.totalorder %s89, %s90
      %p99 = scmp.eq.s32.totalorder %s32, 0
      %p100 = por %p98, %p99
      %p101 = scmp.ne.s32.totalorder %s89, %s90
      %p102 = scmp.eq.s32.totalorder %s33, 1
      %p103 = por %p101, %p102
      %p105 = scmp.ne.s32.totalorder %s90, %s104
      %p106 = scmp.eq.s32.totalorder %s33, 0
      %p107 = por %p105, %p106
      %s109 = sadd.s32 %s108, 1
      %p112 = scmp.eq.s32.totalorder %s27, 1
      %p113 = scmp.ne.s32.totalorder %s108, %s110
      %p114 = scmp.eq.s32.totalorder %s27, 0
      %p115 = por %p113, %p114
      %p116 = scmp.ne.s32.totalorder %s108, %s110
      %p117 = scmp.eq.s32.totalorder %s32, 1
      %p118 = por %p116, %p117
      %p119 = scmp.ne.s32.totalorder %s110, %s111
      %p120 = scmp.eq.s32.totalorder %s32, 0
      %p121 = por %p119, %p120
      %p122 = scmp.ne.s32.totalorder %s110, %s111
      %p123 = scmp.eq.s32.totalorder %s33, 1
      %p124 = por %p122, %p123
      %p126 = scmp.ne.s32.totalorder %s111, %s125
      %p127 = scmp.eq.s32.totalorder %s33, 0
      %p128 = por %p126, %p127
      %s130 = sadd.s32 %s129, 1
      %p133 = scmp.eq.s32.totalorder %s27, 1
      %p134 = scmp.ne.s32.totalorder %s129, %s131
      %p135 = scmp.eq.s32.totalorder %s27, 0
      %p136 = por %p134, %p135
      %p137 = scmp.ne.s32.totalorder %s129, %s131
      %p138 = scmp.eq.s32.totalorder %s32, 1
      %p139 = por %p137, %p138
      %p140 = scmp.ne.s32.totalorder %s131, %s132
      %p141 = scmp.eq.s32.totalorder %s32, 0
      %p142 = por %p140, %p141
      %p143 = scmp.ne.s32.totalorder %s131, %s132
      %p144 = scmp.eq.s32.totalorder %s33, 1
      %p145 = por %p143, %p144
      %p147 = scmp.ne.s32.totalorder %s132, %s146
      %p148 = scmp.eq.s32.totalorder %s33, 0
      %p149 = por %p147, %p148
      %s151 = sadd.s32 %s150, 1
      %p154 = scmp.eq.s32.totalorder %s27, 1
      %p155 = scmp.ne.s32.totalorder %s150, %s152
      %p156 = scmp.eq.s32.totalorder %s27, 0
      %p157 = por %p155, %p156
      %p158 = scmp.ne.s32.totalorder %s150, %s152
      %p159 = scmp.eq.s32.totalorder %s32, 1
      %p160 = por %p158, %p159
      %p161 = scmp.ne.s32.totalorder %s152, %s153
      %p162 = scmp.eq.s32.totalorder %s32, 0
      %p163 = por %p161, %p162
      %p164 = scmp.ne.s32.totalorder %s152, %s153
      %p165 = scmp.eq.s32.totalorder %s33, 1
      %p166 = por %p164, %p165
      %p168 = scmp.ne.s32.totalorder %s153, %s167
      %p169 = scmp.eq.s32.totalorder %s33, 0
      %p170 = por %p168, %p169
      %s172 = sadd.s32 %s171, 1
      %p175 = scmp.eq.s32.totalorder %s27, 1
      %p176 = scmp.ne.s32.totalorder %s171, %s173
      %p177 = scmp.eq.s32.totalorder %s27, 0
      %p178 = por %p176, %p177
      %p179 = scmp.ne.s32.totalorder %s171, %s173
      %p180 = scmp.eq.s32.totalorder %s32, 1
      %p181 = por %p179, %p180
      %p182 = scmp.ne.s32.totalorder %s173, %s174
      %p183 = scmp.eq.s32.totalorder %s32, 0
      %p184 = por %p182, %p183
      %p185 = scmp.ne.s32.totalorder %s173, %s174
      %p186 = scmp.eq.s32.totalorder %s33, 1
      %p187 = por %p185, %p186
      %p189 = scmp.ne.s32.totalorder %s174, %s188
      %p190 = scmp.eq.s32.totalorder %s33, 0
      %p191 = por %p189, %p190
      %s193 = sadd.s32 %s192, 1
      %p196 = scmp.eq.s32.totalorder %s27, 1
      %p197 = scmp.ne.s32.totalorder %s192, %s194
      %p198 = scmp.eq.s32.totalorder %s27, 0
      %p199 = por %p197, %p198
      %p200 = scmp.ne.s32.totalorder %s192, %s194
      %p201 = scmp.eq.s32.totalorder %s32, 1
      %p202 = por %p200, %p201
      %p203 = scmp.ne.s32.totalorder %s194, %s195
      %p204 = scmp.eq.s32.totalorder %s32, 0
      %p205 = por %p203, %p204
      %p206 = scmp.ne.s32.totalorder %s194, %s195
      %p207 = scmp.eq.s32.totalorder %s33, 1
      %p208 = por %p206, %p207
      %p210 = scmp.ne.s32.totalorder %s195, %s209
      %p211 = scmp.eq.s32.totalorder %s33, 0
      %p212 = por %p210, %p211
      %s214 = sadd.s32 %s213, 1
      %p217 = scmp.eq.s32.totalorder %s27, 1
      %p218 = scmp.ne.s32.totalorder %s213, %s215
      %p219 = scmp.eq.s32.totalorder %s27, 0
      %p220 = por %p218, %p219
      %p221 = scmp.ne.s32.totalorder %s213, %s215
      %p222 = scmp.eq.s32.totalorder %s32, 1
      %p223 = por %p221, %p222
      %p224 = scmp.ne.s32.totalorder %s215, %s216
      %p225 = scmp.eq.s32.totalorder %s32, 0
      %p226 = por %p224, %p225
      %p227 = scmp.ne.s32.totalorder %s215, %s216
      %p228 = scmp.eq.s32.totalorder %s33, 1
      %p229 = por %p227, %p228
      %p231 = scmp.ne.s32.totalorder %s216, %s230
      %p232 = scmp.eq.s32.totalorder %s33, 0
      %p233 = por %p231, %p232
      %s235 = sadd.s32 %s234, 1
      %p238 = scmp.eq.s32.totalorder %s27, 1
      %p239 = scmp.ne.s32.totalorder %s234, %s236
      %p240 = scmp.eq.s32.totalorder %s27, 0
      %p241 = por %p239, %p240
      %p242 = scmp.ne.s32.totalorder %s234, %s236
      %p243 = scmp.eq.s32.totalorder %s32, 1
      %p244 = por %p242, %p243
      %p245 = scmp.ne.s32.totalorder %s236, %s237
      %p246 = scmp.eq.s32.totalorder %s32, 0
      %p247 = por %p245, %p246
      %p248 = scmp.ne.s32.totalorder %s236, %s237
      %p249 = scmp.eq.s32.totalorder %s33, 1
      %p250 = por %p248, %p249
      %p252 = scmp.ne.s32.totalorder %s237, %s251
      %p253 = scmp.eq.s32.totalorder %s33, 0
      %p254 = por %p252, %p253
      %s256 = sadd.s32 %s255, 1
      %p259 = scmp.eq.s32.totalorder %s27, 1
      %p260 = scmp.ne.s32.totalorder %s255, %s257
      %p261 = scmp.eq.s32.totalorder %s27, 0
      %p262 = por %p260, %p261
      %p263 = scmp.ne.s32.totalorder %s255, %s257
      %p264 = scmp.eq.s32.totalorder %s32, 1
      %p265 = por %p263, %p264
      %p266 = scmp.ne.s32.totalorder %s257, %s258
      %p267 = scmp.eq.s32.totalorder %s32, 0
      %p268 = por %p266, %p267
      %p269 = scmp.ne.s32.totalorder %s257, %s258
      %p270 = scmp.eq.s32.totalorder %s33, 1
      %p271 = por %p269, %p270
      %p273 = scmp.ne.s32.totalorder %s258, %s272
      %p274 = scmp.eq.s32.totalorder %s33, 0
      %p275 = por %p273, %p274
      %s277 = sadd.s32 %s276, 1
      %p280 = scmp.eq.s32.totalorder %s27, 1
      %p281 = scmp.ne.s32.totalorder %s276, %s278
      %p282 = scmp.eq.s32.totalorder %s27, 0
      %p283 = por %p281, %p282
      %p284 = scmp.ne.s32.totalorder %s276, %s278
      %p285 = scmp.eq.s32.totalorder %s32, 1
      %p286 = por %p284, %p285
      %p287 = scmp.ne.s32.totalorder %s278, %s279
      %p288 = scmp.eq.s32.totalorder %s32, 0
      %p289 = por %p287, %p288
      %p290 = scmp.ne.s32.totalorder %s278, %s279
      %p291 = scmp.eq.s32.totalorder %s33, 1
      %p292 = por %p290, %p291
      %p294 = scmp.ne.s32.totalorder %s279, %s293
      %p295 = scmp.eq.s32.totalorder %s33, 0
      %p296 = por %p294, %p295
      %s298 = sadd.s32 %s297, 1
      %p301 = scmp.eq.s32.totalorder %s27, 1
      %p302 = scmp.ne.s32.totalorder %s297, %s299
      %p303 = scmp.eq.s32.totalorder %s27, 0
      %p304 = por %p302, %p303
      %p305 = scmp.ne.s32.totalorder %s297, %s299
      %p306 = scmp.eq.s32.totalorder %s32, 1
      %p307 = por %p305, %p306
      %p308 = scmp.ne.s32.totalorder %s299, %s300
      %p309 = scmp.eq.s32.totalorder %s32, 0
      %p310 = por %p308, %p309
      %p311 = scmp.ne.s32.totalorder %s299, %s300
      %p312 = scmp.eq.s32.totalorder %s33, 1
      %p313 = por %p311, %p312
      %p315 = scmp.ne.s32.totalorder %s300, %s314
      %p316 = scmp.eq.s32.totalorder %s33, 0
      %p317 = por %p315, %p316
      %s319 = sadd.s32 %s318, 1
      %p322 = scmp.eq.s32.totalorder %s27, 1
      %p323 = scmp.ne.s32.totalorder %s318, %s320
      %p324 = scmp.eq.s32.totalorder %s27, 0
      %p325 = por %p323, %p324
      %p326 = scmp.ne.s32.totalorder %s318, %s320
      %p327 = scmp.eq.s32.totalorder %s32, 1
      %p328 = por %p326, %p327
      %p329 = scmp.ne.s32.totalorder %s320, %s321
      %p330 = scmp.eq.s32.totalorder %s32, 0
      %p331 = por %p329, %p330
      %p332 = scmp.ne.s32.totalorder %s320, %s321
      %p333 = scmp.eq.s32.totalorder %s33, 1
      %p334 = por %p332, %p333
      %p336 = scmp.ne.s32.totalorder %s321, %s335
      %p337 = scmp.eq.s32.totalorder %s33, 0
      %p338 = por %p336, %p337
      %s340 = sadd.s32 %s339, 1
      %p343 = scmp.eq.s32.totalorder %s27, 1
      %p344 = scmp.ne.s32.totalorder %s339, %s341
      %p345 = scmp.eq.s32.totalorder %s27, 0
      %p346 = por %p344, %p345
      %p347 = scmp.ne.s32.totalorder %s339, %s341
      %p348 = scmp.eq.s32.totalorder %s32, 1
      %p349 = por %p347, %p348
      %p350 = scmp.ne.s32.totalorder %s341, %s342
      %p351 = scmp.eq.s32.totalorder %s32, 0
      %p352 = por %p350, %p351
      %p353 = scmp.ne.s32.totalorder %s341, %s342
      %p354 = scmp.eq.s32.totalorder %s33, 1
      %p355 = por %p353, %p354
      %p357 = scmp.ne.s32.totalorder %s342, %s356
      %p358 = scmp.eq.s32.totalorder %s33, 0
      %p359 = por %p357, %p358
      %s361 = sadd.s32 %s360, 1
      %p364 = scmp.eq.s32.totalorder %s27, 1
      %p365 = scmp.ne.s32.totalorder %s360, %s362
      %p366 = scmp.eq.s32.totalorder %s27, 0
      %p367 = por %p365, %p366
      %p368 = scmp.ne.s32.totalorder %s360, %s362
      %p369 = scmp.eq.s32.totalorder %s32, 1
      %p370 = por %p368, %p369
      %p371 = scmp.ne.s32.totalorder %s362, %s363
      %p372 = scmp.eq.s32.totalorder %s32, 0
      %p373 = por %p371, %p372
      %p374 = scmp.ne.s32.totalorder %s362, %s363
      %p375 = scmp.eq.s32.totalorder %s33, 1
      %p376 = por %p374, %p375
      %p378 = scmp.ne.s32.totalorder %s363, %s377
      %p379 = scmp.eq.s32.totalorder %s33, 0
      %p380 = por %p378, %p379
      %s382 = sadd.s32 %s381, 1
      %p385 = scmp.eq.s32.totalorder %s27, 1
      %p386 = scmp.ne.s32.totalorder %s381, %s383
      %p387 = scmp.eq.s32.totalorder %s27, 0
      %p388 = por %p386, %p387
      %p389 = scmp.ne.s32.totalorder %s381, %s383
      %p390 = scmp.eq.s32.totalorder %s32, 1
      %p391 = por %p389, %p390
      %p392 = scmp.ne.s32.totalorder %s383, %s384
      %p393 = scmp.eq.s32.totalorder %s32, 0
      %p394 = por %p392, %p393
      %p395 = scmp.ne.s32.totalorder %s383, %s384
      %p396 = scmp.eq.s32.totalorder %s33, 1
      %p397 = por %p395, %p396
      %p399 = scmp.ne.s32.totalorder %s384, %s398
      %p400 = scmp.eq.s32.totalorder %s33, 0
      %p401 = por %p399, %p400
      %s403 = sadd.s32 %s402, 1
      %p406 = scmp.eq.s32.totalorder %s27, 1
      %p407 = scmp.ne.s32.totalorder %s402, %s404
      %p408 = scmp.eq.s32.totalorder %s27, 0
      %p409 = por %p407, %p408
      %p410 = scmp.ne.s32.totalorder %s402, %s404
      %p411 = scmp.eq.s32.totalorder %s32, 1
      %p412 = por %p410, %p411
      %p413 = scmp.ne.s32.totalorder %s404, %s405
      %p414 = scmp.eq.s32.totalorder %s32, 0
      %p415 = por %p413, %p414
      %p416 = scmp.ne.s32.totalorder %s404, %s405
      %p417 = scmp.eq.s32.totalorder %s33, 1
      %p418 = por %p416, %p417
      %p420 = scmp.ne.s32.totalorder %s405, %s419
      %p421 = scmp.eq.s32.totalorder %s33, 0
      %p422 = por %p420, %p421
      %s423 = ssub.s32 %s27, %s34
      %p424 = scmp.eq.s32.totalorder %s423, 0
      %s426 = sadd.s32 %s425, 1
      %s427 = scalar_select %p424, %s425, %s426
      %p430 = pneg %p424
      %p431 = scmp.eq.s32.totalorder %s27, 1
      %p432 = por %p430, %p431
      %p433 = scmp.ne.s32.totalorder %s425, %s428
      %p434 = scmp.eq.s32.totalorder %s27, 0
      %p435 = por %p433, %p434
      %p436 = scmp.ne.s32.totalorder %s425, %s428
      %p437 = scmp.eq.s32.totalorder %s32, 1
      %p438 = por %p436, %p437
      %p439 = scmp.ne.s32.totalorder %s428, %s429
      %p440 = scmp.eq.s32.totalorder %s32, 0
      %p441 = por %p439, %p440
      %p442 = scmp.ne.s32.totalorder %s428, %s429
      %p443 = scmp.eq.s32.totalorder %s33, 1
      %p444 = por %p442, %p443
      %p446 = scmp.ne.s32.totalorder %s429, %s445
      %p447 = scmp.eq.s32.totalorder %s33, 0
      %p448 = por %p446, %p447
      %p449 = scmp.le.s32.totalorder 1, %s27
      %p450 = scmp.lt.s32.totalorder %s27, 3
      %p451 = pnand %p449, %p450
      %p452 = pneg %p451
      // Predicated region
      $region9: #{tpu_custom_call.1} parent=5 // pred_check
        _
      $region10: #{tpu_custom_call.1} parent=5 // pred_check_branch
        %454 = sbr.rel (%p451) target = $region12
      $region11: #{tpu_custom_call.1} parent=5 // pred_region
        %s455 = ssub.s32 %s27, 1
        // Predicated region
        $region13: #{tpu_custom_call.1} parent=11 // pred_check
          %p456 = pneg %p100
        $region14: #{tpu_custom_call.1} parent=11 // pred_check_branch
          %458 = sbr.rel (%p456) target = $region16
        $region15: #{tpu_custom_call.1} parent=11 // pred_region
          _
        $region16: #{tpu_custom_call.1} parent=11 // pred_fallthru
          _
        // Predicated region
        $region17: #{tpu_custom_call.1} parent=11 // pred_check
          %p459 = pneg %p121
        $region18: #{tpu_custom_call.1} parent=11 // pred_check_branch
          %461 = sbr.rel (%p459) target = $region20
        $region19: #{tpu_custom_call.1} parent=11 // pred_region
          _
        $region20: #{tpu_custom_call.1} parent=11 // pred_fallthru
          _
        // Predicated region
        $region21: #{tpu_custom_call.1} parent=11 // pred_check
          %p462 = pneg %p142
        $region22: #{tpu_custom_call.1} parent=11 // pred_check_branch
          %464 = sbr.rel (%p462) target = $region24
        $region23: #{tpu_custom_call.1} parent=11 // pred_region
          _
        $region24: #{tpu_custom_call.1} parent=11 // pred_fallthru
          _
        // Predicated region
        $region25: #{tpu_custom_call.1} parent=11 // pred_check
          %p465 = pneg %p163
        $region26: #{tpu_custom_call.1} parent=11 // pred_check_branch
          %467 = sbr.rel (%p465) target = $region28
        $region27: #{tpu_custom_call.1} parent=11 // pred_region
          _
        $region28: #{tpu_custom_call.1} parent=11 // pred_fallthru
          _
        // Predicated region
        $region29: #{tpu_custom_call.1} parent=11 // pred_check
          %p468 = pneg %p184
        $region30: #{tpu_custom_call.1} parent=11 // pred_check_branch
          %470 = sbr.rel (%p468) target = $region32
        $region31: #{tpu_custom_call.1} parent=11 // pred_region
          _
        $region32: #{tpu_custom_call.1} parent=11 // pred_fallthru
          _
        // Predicated region
        $region33: #{tpu_custom_call.1} parent=11 // pred_check
          %p471 = pneg %p205
        $region34: #{tpu_custom_call.1} parent=11 // pred_check_branch
          %473 = sbr.rel (%p471) target = $region36
        $region35: #{tpu_custom_call.1} parent=11 // pred_region
          _
        $region36: #{tpu_custom_call.1} parent=11 // pred_fallthru
          _
        // Predicated region
        $region37: #{tpu_custom_call.1} parent=11 // pred_check
          %p474 = pneg %p226
        $region38: #{tpu_custom_call.1} parent=11 // pred_check_branch
          %476 = sbr.rel (%p474) target = $region40
        $region39: #{tpu_custom_call.1} parent=11 // pred_region
          _
        $region40: #{tpu_custom_call.1} parent=11 // pred_fallthru
          _
        // Predicated region
        $region41: #{tpu_custom_call.1} parent=11 // pred_check
          %p477 = pneg %p247
        $region42: #{tpu_custom_call.1} parent=11 // pred_check_branch
          %479 = sbr.rel (%p477) target = $region44
        $region43: #{tpu_custom_call.1} parent=11 // pred_region
          _
        $region44: #{tpu_custom_call.1} parent=11 // pred_fallthru
          _
        // Predicated region
        $region45: #{tpu_custom_call.1} parent=11 // pred_check
          %p480 = pneg %p268
        $region46: #{tpu_custom_call.1} parent=11 // pred_check_branch
          %482 = sbr.rel (%p480) target = $region48
        $region47: #{tpu_custom_call.1} parent=11 // pred_region
          _
        $region48: #{tpu_custom_call.1} parent=11 // pred_fallthru
          _
        // Predicated region
        $region49: #{tpu_custom_call.1} parent=11 // pred_check
          %p483 = pneg %p289
        $region50: #{tpu_custom_call.1} parent=11 // pred_check_branch
          %485 = sbr.rel (%p483) target = $region52
        $region51: #{tpu_custom_call.1} parent=11 // pred_region
          _
        $region52: #{tpu_custom_call.1} parent=11 // pred_fallthru
          _
        // Predicated region
        $region53: #{tpu_custom_call.1} parent=11 // pred_check
          %p486 = pneg %p310
        $region54: #{tpu_custom_call.1} parent=11 // pred_check_branch
          %488 = sbr.rel (%p486) target = $region56
        $region55: #{tpu_custom_call.1} parent=11 // pred_region
          _
        $region56: #{tpu_custom_call.1} parent=11 // pred_fallthru
          _
        // Predicated region
        $region57: #{tpu_custom_call.1} parent=11 // pred_check
          %p489 = pneg %p331
        $region58: #{tpu_custom_call.1} parent=11 // pred_check_branch
          %491 = sbr.rel (%p489) target = $region60
        $region59: #{tpu_custom_call.1} parent=11 // pred_region
          _
        $region60: #{tpu_custom_call.1} parent=11 // pred_fallthru
          _
        // Predicated region
        $region61: #{tpu_custom_call.1} parent=11 // pred_check
          %p492 = pneg %p352
        $region62: #{tpu_custom_call.1} parent=11 // pred_check_branch
          %494 = sbr.rel (%p492) target = $region64
        $region63: #{tpu_custom_call.1} parent=11 // pred_region
          _
        $region64: #{tpu_custom_call.1} parent=11 // pred_fallthru
          _
        // Predicated region
        $region65: #{tpu_custom_call.1} parent=11 // pred_check
          %p495 = pneg %p373
        $region66: #{tpu_custom_call.1} parent=11 // pred_check_branch
          %497 = sbr.rel (%p495) target = $region68
        $region67: #{tpu_custom_call.1} parent=11 // pred_region
          _
        $region68: #{tpu_custom_call.1} parent=11 // pred_fallthru
          _
        // Predicated region
        $region69: #{tpu_custom_call.1} parent=11 // pred_check
          %p498 = pneg %p394
        $region70: #{tpu_custom_call.1} parent=11 // pred_check_branch
          %500 = sbr.rel (%p498) target = $region72
        $region71: #{tpu_custom_call.1} parent=11 // pred_region
          _
        $region72: #{tpu_custom_call.1} parent=11 // pred_fallthru
          _
        // Predicated region
        $region73: #{tpu_custom_call.1} parent=11 // pred_check
          %p501 = pneg %p415
        $region74: #{tpu_custom_call.1} parent=11 // pred_check_branch
          %503 = sbr.rel (%p501) target = $region76
        $region75: #{tpu_custom_call.1} parent=11 // pred_region
          _
        $region76: #{tpu_custom_call.1} parent=11 // pred_fallthru
          _
      $region12: #{tpu_custom_call.1} parent=5 // pred_fallthru
        _
      %p504 = scmp.lt.s32.totalorder %s27, 2
      // Predicated region
      $region77: #{tpu_custom_call.1} parent=5 // pred_check
        %p505 = pneg %p504
      $region78: #{tpu_custom_call.1} parent=5 // pred_check_branch
        %507 = sbr.rel (%p505) target = $region80
      $region79: #{tpu_custom_call.1} parent=5 // pred_region
        // Predicated region
        $region81: #{tpu_custom_call.1} parent=79 // pred_check
          %p508 = pneg %p47
        $region82: #{tpu_custom_call.1} parent=79 // pred_check_branch
          %510 = sbr.rel (%p508) target = $region84
        $region83: #{tpu_custom_call.1} parent=79 // pred_region
          %p511 = scmp.lt.s32.totalorder %s27, 1
          %s512 = scalar_select %p511, %s27, 1
          %s513 = smul.addr %s512, 8
          %s514 = scalar_lea.vmem %s0, %s513
        $region84: #{tpu_custom_call.1} parent=79 // pred_fallthru
          _
        // Predicated region
        $region85: #{tpu_custom_call.1} parent=79 // pred_check
          %p515 = pneg %p73
        $region86: #{tpu_custom_call.1} parent=79 // pred_check_branch
          %517 = sbr.rel (%p515) target = $region88
        $region87: #{tpu_custom_call.1} parent=79 // pred_region
          %p518 = scmp.lt.s32.totalorder %s27, 1
          %s519 = scalar_select %p518, %s27, 1
          %s520 = smul.addr %s519, 8
          %s521 = scalar_lea.vmem %s1, %s520
        $region88: #{tpu_custom_call.1} parent=79 // pred_fallthru
          _
      $region80: #{tpu_custom_call.1} parent=5 // pred_fallthru
        _
      %p522 = scmp.le.s32.totalorder 1, %s27
      %p523 = scmp.lt.s32.totalorder %s27, 3
      %p524 = pnand %p522, %p523
      %p525 = pneg %p524
      // Predicated region
      $region89: #{tpu_custom_call.1} parent=5 // pred_check
        _
      $region90: #{tpu_custom_call.1} parent=5 // pred_check_branch
        %527 = sbr.rel (%p524) target = $region92
      $region91: #{tpu_custom_call.1} parent=5 // pred_region
        %s528 = ssub.s32 %s27, 1
        %p529 = scmp.lt.s32.totalorder %s32, 1
        %s530 = scalar_select %p529, %s32, 1
        %s531 = smul.addr %s530, 8
        %s532 = scalar_lea.vmem %s0, %s531
        %p533 = pneg %p53
        %p534 = pneg %p50
        %p535 = scmp.lt.s32.totalorder %s32, 1
        %s536 = scalar_select %p535, %s32, 1
        %s537 = smul.addr %s536, 8
        %s538 = scalar_lea.vmem %s1, %s537
        %p539 = pneg %p79
        %p540 = pneg %p76
        %p541 = pneg %p100
        %p542 = pneg %p97
        %p543 = pneg %p121
        %p544 = pneg %p118
        %p545 = pneg %p142
        %p546 = pneg %p139
        %p547 = pneg %p163
        %p548 = pneg %p160
        %p549 = pneg %p184
        %p550 = pneg %p181
        %p551 = pneg %p205
        %p552 = pneg %p202
        %p553 = pneg %p226
        %p554 = pneg %p223
        %p555 = pneg %p247
        %p556 = pneg %p244
        %p557 = pneg %p268
        %p558 = pneg %p265
        %p559 = pneg %p289
        %p560 = pneg %p286
        %p561 = pneg %p310
        %p562 = pneg %p307
        %p563 = pneg %p331
        %p564 = pneg %p328
        %p565 = pneg %p352
        %p566 = pneg %p349
        %p567 = pneg %p373
        %p568 = pneg %p370
        %p569 = pneg %p394
        %p570 = pneg %p391
        %p571 = pneg %p415
        %p572 = pneg %p412
        %p573 = pneg %p441
        %p574 = pneg %p438
        %s575 = sand.u32 %s428, 1
        %s576 = scalar_lea.sflag [#allocation6], %s575
        %s577 = sand.u32 %s428, 1
        %s578 = smul.addr %s577, 8
        %s579 = scalar_lea.vmem [#allocation5], %s578
        %p580 = scmp.lt.s32.totalorder %s32, 1
        %s581 = scalar_select %p580, %s32, 1
        %s582 = smul.addr %s581, 8
        %s583 = scalar_lea.vmem %s0, %s582
        %p584 = scmp.lt.s32.totalorder %s32, 1
        %s585 = scalar_select %p584, %s32, 1
        %s586 = smul.addr %s585, 8
        %s587 = scalar_lea.vmem %s1, %s586
        %v588 = vld [vmem:[%s583] sm:$0xff]
        %v589 = vld [vmem:[%s2] sm:$0xff]
        %v590 = vld [vmem:[%s2 + $0x8] sm:$0xff]
        %v591 = vld [vmem:[%s2 + $0x10] sm:$0xff]
        %v592 = vld [vmem:[%s2 + $0x18] sm:$0xff]
        %v593 = vld [vmem:[%s3] sm:$0x1]
        %v595 = vlaneseq
        %v596 = vshrl.u32 %v595, 7
        %v597 = vsub.s32 0, %v596
        %v598 = vrot.slane %v593, %v597
        %vm600 = vcmask 261120
        %v602 = vsel %vm600, %v588, 0
        %604 = vmatprep.subr.mxu0 0.0
        %605 = vmatpush1.msra.mxu0 %v589
        %606 = vmatprep.subr.mxu0 0.0
        %607 = vmatpush1.msra.mxu0 %v590
        %608 = vmatprep.subr.mxu0 0.0
        %609 = vmatpush1.msra.mxu0 %v591
        %610 = vmatprep.subr.mxu0 0.0
        %611 = vmatpush1.msra.mxu0 %v592
        %612 = vmatprep.subr.mxu0 0.0
        %613 = vmatpush1.msra.mxu0 0.0
        %614 = vmatprep.subr.mxu0 0.0
        %615 = vmatpush1.msra.mxu0 0.0
        %616 = vmatprep.subr.mxu0 0.0
        %617 = vmatpush1.msra.mxu0 0.0
        %618 = vmatprep.subr.mxu0 0.0
        %619 = vmatpush1.msra.mxu0 0.0
        %620 = vmatprep.subr.mxu0 0.0
        %621 = vmatpush1.msra.mxu0 0.0
        %622 = vmatprep.subr.mxu0 0.0
        %623 = vmatpush1.msra.mxu0 0.0
        %624 = vmatprep.subr.mxu0 0.0
        %625 = vmatpush1.msra.mxu0 0.0
        %626 = vmatprep.subr.mxu0 0.0
        %627 = vmatpush1.msra.mxu0 0.0
        %628 = vmatprep.subr.mxu0 0.0
        %629 = vmatpush1.msra.mxu0 0.0
        %630 = vmatprep.subr.mxu0 0.0
        %631 = vmatpush1.msra.mxu0 0.0
        %632 = vmatprep.subr.mxu0 0.0
        %633 = vmatpush1.msra.mxu0 0.0
        %634 = vmatprep.subr.mxu0 0.0
        %635 = vmatpush1.msra.mxu0 0.0
        %636 = vmatprep.subr.mxu0 0.0
        %637 = vmatpush1.msra.mxu0 0.0
        %638 = vmatprep.subr.mxu0 0.0
        %639 = vmatpush1.msra.mxu0 0.0
        %640 = vmatprep.subr.mxu0 0.0
        %641 = vmatpush1.msra.mxu0 0.0
        %642 = vmatprep.subr.mxu0 0.0
        %643 = vmatpush1.msra.mxu0 0.0
        %644 = vmatprep.subr.mxu0 0.0
        %645 = vmatpush1.msra.mxu0 0.0
        %646 = vmatprep.subr.mxu0 0.0
        %647 = vmatpush1.msra.mxu0 0.0
        %648 = vmatprep.subr.mxu0 0.0
        %649 = vmatpush1.msra.mxu0 0.0
        %650 = vmatprep.subr.mxu0 0.0
        %651 = vmatpush1.msra.mxu0 0.0
        %652 = vmatprep.subr.mxu0 0.0
        %653 = vmatpush1.msra.mxu0 0.0
        %654 = vmatprep.subr.mxu0 0.0
        %655 = vmatpush1.msra.mxu0 0.0
        %656 = vmatprep.subr.mxu0 0.0
        %657 = vmatpush1.msra.mxu0 0.0
        %658 = vmatprep.subr.mxu0 0.0
        %659 = vmatpush1.msra.mxu0 0.0
        %660 = vmatprep.subr.mxu0 0.0
        %661 = vmatpush1.msra.mxu0 0.0
        %662 = vmatprep.subr.mxu0 0.0
        %663 = vmatpush1.msra.mxu0 0.0
        %664 = vmatprep.subr.mxu0 0.0
        %665 = vmatpush1.msra.mxu0 0.0
        %666 = vmatprep.subr.mxu0 0.0
        %667 = vmatpush1.msra.mxu0 0.0
        %668 = vmatprep.mubr.f32.mxu0 0.0
        %669 = vmatmul.mubr.f32.gmra.mrb[0].mxu0 %v602
        %v670 = vpop.f32.mrb[0].mxu0
        %v671 = vadd.f32 %v598, %v670
        %v672 = vpop.f32.mrb[0].mxu0
        %673 = vdwg.mxu0
        %674 = vst.msk [vmem:[#allocation2] sm:$0xff] %vm600, %v671
        %v675 = vld [vmem:[%s4] sm:$0xff]
        %v676 = vld [vmem:[%s4 + $0x8] sm:$0xff]
        %v677 = vld [vmem:[%s4 + $0x10] sm:$0xff]
        %v678 = vld [vmem:[%s4 + $0x18] sm:$0xff]
        %v679 = vld [vmem:[%s5] sm:$0x1]
        %v681 = vlaneseq
        %v682 = vshrl.u32 %v681, 7
        %v683 = vsub.s32 0, %v682
        %v684 = vrot.slane %v679, %v683
        %686 = vmatprep.subr.mxu0 0.0
        %687 = vmatpush1.msra.mxu0 %v675
        %688 = vmatprep.subr.mxu0 0.0
        %689 = vmatpush1.msra.mxu0 %v676
        %690 = vmatprep.subr.mxu0 0.0
        %691 = vmatpush1.msra.mxu0 %v677
        %692 = vmatprep.subr.mxu0 0.0
        %693 = vmatpush1.msra.mxu0 %v678
        %694 = vmatprep.subr.mxu0 0.0
        %695 = vmatpush1.msra.mxu0 0.0
        %696 = vmatprep.subr.mxu0 0.0
        %697 = vmatpush1.msra.mxu0 0.0
        %698 = vmatprep.subr.mxu0 0.0
        %699 = vmatpush1.msra.mxu0 0.0
        %700 = vmatprep.subr.mxu0 0.0
        %701 = vmatpush1.msra.mxu0 0.0
        %702 = vmatprep.subr.mxu0 0.0
        %703 = vmatpush1.msra.mxu0 0.0
        %704 = vmatprep.subr.mxu0 0.0
        %705 = vmatpush1.msra.mxu0 0.0
        %706 = vmatprep.subr.mxu0 0.0
        %707 = vmatpush1.msra.mxu0 0.0
        %708 = vmatprep.subr.mxu0 0.0
        %709 = vmatpush1.msra.mxu0 0.0
        %710 = vmatprep.subr.mxu0 0.0
        %711 = vmatpush1.msra.mxu0 0.0
        %712 = vmatprep.subr.mxu0 0.0
        %713 = vmatpush1.msra.mxu0 0.0
        %714 = vmatprep.subr.mxu0 0.0
        %715 = vmatpush1.msra.mxu0 0.0
        %716 = vmatprep.subr.mxu0 0.0
        %717 = vmatpush1.msra.mxu0 0.0
        %718 = vmatprep.subr.mxu0 0.0
        %719 = vmatpush1.msra.mxu0 0.0
        %720 = vmatprep.subr.mxu0 0.0
        %721 = vmatpush1.msra.mxu0 0.0
        %722 = vmatprep.subr.mxu0 0.0
        %723 = vmatpush1.msra.mxu0 0.0
        %724 = vmatprep.subr.mxu0 0.0
        %725 = vmatpush1.msra.mxu0 0.0
        %726 = vmatprep.subr.mxu0 0.0
        %727 = vmatpush1.msra.mxu0 0.0
        %728 = vmatprep.subr.mxu0 0.0
        %729 = vmatpush1.msra.mxu0 0.0
        %730 = vmatprep.subr.mxu0 0.0
        %731 = vmatpush1.msra.mxu0 0.0
        %732 = vmatprep.subr.mxu0 0.0
        %733 = vmatpush1.msra.mxu0 0.0
        %734 = vmatprep.subr.mxu0 0.0
        %735 = vmatpush1.msra.mxu0 0.0
        %736 = vmatprep.subr.mxu0 0.0
        %737 = vmatpush1.msra.mxu0 0.0
        %738 = vmatprep.subr.mxu0 0.0
        %739 = vmatpush1.msra.mxu0 0.0
        %740 = vmatprep.subr.mxu0 0.0
        %741 = vmatpush1.msra.mxu0 0.0
        %742 = vmatprep.subr.mxu0 0.0
        %743 = vmatpush1.msra.mxu0 0.0
        %744 = vmatprep.subr.mxu0 0.0
        %745 = vmatpush1.msra.mxu0 0.0
        %746 = vmatprep.subr.mxu0 0.0
        %747 = vmatpush1.msra.mxu0 0.0
        %748 = vmatprep.subr.mxu0 0.0
        %749 = vmatpush1.msra.mxu0 0.0
        %750 = vmatprep.mubr.f32.mxu0 0.0
        %751 = vmatmul.mubr.f32.gmra.mrb[0].mxu0 %v602
        %v752 = vpop.f32.mrb[0].mxu0
        %v753 = vadd.f32 %v684, %v752
        %v754 = vpop.f32.mrb[0].mxu0
        %755 = vdwg.mxu0
        %756 = vst.msk [vmem:[#allocation3] sm:$0xff] %vm600, %v753
        %v757 = vld [vmem:[%s6] sm:$0xff]
        %v758 = vld [vmem:[%s6 + $0x8] sm:$0xff]
        %v759 = vld [vmem:[%s6 + $0x10] sm:$0xff]
        %v760 = vld [vmem:[%s6 + $0x18] sm:$0xff]
        %v761 = vld [vmem:[%s7] sm:$0x1]
        %v763 = vlaneseq
        %v764 = vshrl.u32 %v763, 7
        %v765 = vsub.s32 0, %v764
        %v766 = vrot.slane %v761, %v765
        %768 = vmatprep.subr.mxu0 0.0
        %769 = vmatpush1.msra.mxu0 %v757
        %770 = vmatprep.subr.mxu0 0.0
        %771 = vmatpush1.msra.mxu0 %v758
        %772 = vmatprep.subr.mxu0 0.0
        %773 = vmatpush1.msra.mxu0 %v759
        %774 = vmatprep.subr.mxu0 0.0
        %775 = vmatpush1.msra.mxu0 %v760
        %776 = vmatprep.subr.mxu0 0.0
        %777 = vmatpush1.msra.mxu0 0.0
        %778 = vmatprep.subr.mxu0 0.0
        %779 = vmatpush1.msra.mxu0 0.0
        %780 = vmatprep.subr.mxu0 0.0
        %781 = vmatpush1.msra.mxu0 0.0
        %782 = vmatprep.subr.mxu0 0.0
        %783 = vmatpush1.msra.mxu0 0.0
        %784 = vmatprep.subr.mxu0 0.0
        %785 = vmatpush1.msra.mxu0 0.0
        %786 = vmatprep.subr.mxu0 0.0
        %787 = vmatpush1.msra.mxu0 0.0
        %788 = vmatprep.subr.mxu0 0.0
        %789 = vmatpush1.msra.mxu0 0.0
        %790 = vmatprep.subr.mxu0 0.0
        %791 = vmatpush1.msra.mxu0 0.0
        %792 = vmatprep.subr.mxu0 0.0
        %793 = vmatpush1.msra.mxu0 0.0
        %794 = vmatprep.subr.mxu0 0.0
        %795 = vmatpush1.msra.mxu0 0.0
        %796 = vmatprep.subr.mxu0 0.0
        %797 = vmatpush1.msra.mxu0 0.0
        %798 = vmatprep.subr.mxu0 0.0
        %799 = vmatpush1.msra.mxu0 0.0
        %800 = vmatprep.subr.mxu0 0.0
        %801 = vmatpush1.msra.mxu0 0.0
        %802 = vmatprep.subr.mxu0 0.0
        %803 = vmatpush1.msra.mxu0 0.0
        %804 = vmatprep.subr.mxu0 0.0
        %805 = vmatpush1.msra.mxu0 0.0
        %806 = vmatprep.subr.mxu0 0.0
        %807 = vmatpush1.msra.mxu0 0.0
        %808 = vmatprep.subr.mxu0 0.0
        %809 = vmatpush1.msra.mxu0 0.0
        %810 = vmatprep.subr.mxu0 0.0
        %811 = vmatpush1.msra.mxu0 0.0
        %812 = vmatprep.subr.mxu0 0.0
        %813 = vmatpush1.msra.mxu0 0.0
        %814 = vmatprep.subr.mxu0 0.0
        %815 = vmatpush1.msra.mxu0 0.0
        %816 = vmatprep.subr.mxu0 0.0
        %817 = vmatpush1.msra.mxu0 0.0
        %818 = vmatprep.subr.mxu0 0.0
        %819 = vmatpush1.msra.mxu0 0.0
        %820 = vmatprep.subr.mxu0 0.0
        %821 = vmatpush1.msra.mxu0 0.0
        %822 = vmatprep.subr.mxu0 0.0
        %823 = vmatpush1.msra.mxu0 0.0
        %824 = vmatprep.subr.mxu0 0.0
        %825 = vmatpush1.msra.mxu0 0.0
        %826 = vmatprep.subr.mxu0 0.0
        %827 = vmatpush1.msra.mxu0 0.0
        %828 = vmatprep.subr.mxu0 0.0
        %829 = vmatpush1.msra.mxu0 0.0
        %830 = vmatprep.subr.mxu0 0.0
        %831 = vmatpush1.msra.mxu0 0.0
        %832 = vmatprep.mubr.f32.mxu0 0.0
        %833 = vmatmul.mubr.f32.gmra.mrb[0].mxu0 %v602
        %v834 = vpop.f32.mrb[0].mxu0
        %v835 = vadd.f32 %v766, %v834
        %v836 = vpop.f32.mrb[0].mxu0
        %837 = vdwg.mxu0
        %838 = vst.msk [vmem:[#allocation4] sm:$0xff] %vm600, %v835
        %v839 = vld [vmem:[%s587] sm:$0xff]
        %v840 = vld [vmem:[#allocation2] sm:$0xff]
        %v841 = vld [vmem:[#allocation3] sm:$0xff]
        %v842 = vld [vmem:[#allocation4] sm:$0xff]
        %vm843 = vcmask 64512
        %v845 = vsel %vm843, %v840, 0
        %v848 = vsel %vm843, %v841, 0
        %850 = vmatprep.subr.mxu0 0.0
        %851 = vmatpush1.xpose.msra.mxu0 %v848
        %852 = vmatprep.subr.mxu0 0.0
        %853 = vmatpush1.xpose.msra.mxu0 0.0
        %854 = vmatprep.subr.mxu0 0.0
        %855 = vmatpush1.xpose.msra.mxu0 0.0
        %856 = vmatprep.subr.mxu0 0.0
        %857 = vmatpush1.xpose.msra.mxu0 0.0
        %858 = vmatprep.subr.mxu0 0.0
        %859 = vmatpush1.xpose.msra.mxu0 0.0
        %860 = vmatprep.subr.mxu0 0.0
        %861 = vmatpush1.xpose.msra.mxu0 0.0
        %862 = vmatprep.subr.mxu0 0.0
        %863 = vmatpush1.xpose.msra.mxu0 0.0
        %864 = vmatprep.subr.mxu0 0.0
        %865 = vmatpush1.xpose.msra.mxu0 0.0
        %866 = vmatprep.subr.mxu0 0.0
        %867 = vmatpush1.xpose.msra.mxu0 0.0
        %868 = vmatprep.subr.mxu0 0.0
        %869 = vmatpush1.xpose.msra.mxu0 0.0
        %870 = vmatprep.subr.mxu0 0.0
        %871 = vmatpush1.xpose.msra.mxu0 0.0
        %872 = vmatprep.subr.mxu0 0.0
        %873 = vmatpush1.xpose.msra.mxu0 0.0
        %874 = vmatprep.subr.mxu0 0.0
        %875 = vmatpush1.xpose.msra.mxu0 0.0
        %876 = vmatprep.subr.mxu0 0.0
        %877 = vmatpush1.xpose.msra.mxu0 0.0
        %878 = vmatprep.subr.mxu0 0.0
        %879 = vmatpush1.xpose.msra.mxu0 0.0
        %880 = vmatprep.subr.mxu0 0.0
        %881 = vmatpush1.xpose.msra.mxu0 0.0
        %882 = vmatprep.subr.mxu0 0.0
        %883 = vmatpush1.xpose.msra.mxu0 0.0
        %884 = vmatprep.subr.mxu0 0.0
        %885 = vmatpush1.xpose.msra.mxu0 0.0
        %886 = vmatprep.subr.mxu0 0.0
        %887 = vmatpush1.xpose.msra.mxu0 0.0
        %888 = vmatprep.subr.mxu0 0.0
        %889 = vmatpush1.xpose.msra.mxu0 0.0
        %890 = vmatprep.subr.mxu0 0.0
        %891 = vmatpush1.xpose.msra.mxu0 0.0
        %892 = vmatprep.subr.mxu0 0.0
        %893 = vmatpush1.xpose.msra.mxu0 0.0
        %894 = vmatprep.subr.mxu0 0.0
        %895 = vmatpush1.xpose.msra.mxu0 0.0
        %896 = vmatprep.subr.mxu0 0.0
        %897 = vmatpush1.xpose.msra.mxu0 0.0
        %898 = vmatprep.subr.mxu0 0.0
        %899 = vmatpush1.xpose.msra.mxu0 0.0
        %900 = vmatprep.subr.mxu0 0.0
        %901 = vmatpush1.xpose.msra.mxu0 0.0
        %902 = vmatprep.subr.mxu0 0.0
        %903 = vmatpush1.xpose.msra.mxu0 0.0
        %904 = vmatprep.subr.mxu0 0.0
        %905 = vmatpush1.xpose.msra.mxu0 0.0
        %906 = vmatprep.subr.mxu0 0.0
        %907 = vmatpush1.xpose.msra.mxu0 0.0
        %908 = vmatprep.subr.mxu0 0.0
        %909 = vmatpush1.xpose.msra.mxu0 0.0
        %910 = vmatprep.subr.mxu0 0.0
        %911 = vmatpush1.xpose.msra.mxu0 0.0
        %912 = vmatprep.subr.mxu0 0.0
        %913 = vmatpush1.xpose.msra.mxu0 0.0
        %914 = vmatprep.mubr.f32.mxu0 0.0
        %915 = vmatmul.mubr.f32.gmra.mrb[0].mxu0 %v845
        %v916 = vpop.f32.mrb[0].mxu0
        %v917 = vadd.f32 %v839, %v916
        %v918 = vpop.f32.mrb[0].mxu0
        %919 = vdwg.mxu0
        %v920 = vsel %vm843, %v917, -inf
        %921 = vmax.xlane.f32.xlu0 %v920
        %v922 = vpop.xlane.xlu0 %921
        %v923 = vsub.f32 %v917, %v922
        %v924 = vmul.f32 %v923, 1.442695
        %v925 = vpow.pop %v924
        %v926 = vsel %vm843, %v925, 0.0
        %927 = vadd.xlane.f32.xlu0 %v926
        %v928 = vpop.xlane.xlu0 %927
        %v930 = vsel %vm843, %v925, 0
        %932 = vmatprep.subr.mxu0 0.0
        %933 = vmatpush1.msra.mxu0 %v842
        %934 = vmatprep.subr.mxu0 0.0
        %935 = vmatpush1.msra.mxu0 0.0
        %936 = vmatprep.subr.mxu0 0.0
        %937 = vmatpush1.msra.mxu0 0.0
        %938 = vmatprep.subr.mxu0 0.0
        %939 = vmatpush1.msra.mxu0 0.0
        %940 = vmatprep.subr.mxu0 0.0
        %941 = vmatpush1.msra.mxu0 0.0
        %942 = vmatprep.subr.mxu0 0.0
        %943 = vmatpush1.msra.mxu0 0.0
        %944 = vmatprep.subr.mxu0 0.0
        %945 = vmatpush1.msra.mxu0 0.0
        %946 = vmatprep.subr.mxu0 0.0
        %947 = vmatpush1.msra.mxu0 0.0
        %948 = vmatprep.subr.mxu0 0.0
        %949 = vmatpush1.msra.mxu0 0.0
        %950 = vmatprep.subr.mxu0 0.0
        %951 = vmatpush1.msra.mxu0 0.0
        %952 = vmatprep.subr.mxu0 0.0
        %953 = vmatpush1.msra.mxu0 0.0
        %954 = vmatprep.subr.mxu0 0.0
        %955 = vmatpush1.msra.mxu0 0.0
        %956 = vmatprep.subr.mxu0 0.0
        %957 = vmatpush1.msra.mxu0 0.0
        %958 = vmatprep.subr.mxu0 0.0
        %959 = vmatpush1.msra.mxu0 0.0
        %960 = vmatprep.subr.mxu0 0.0
        %961 = vmatpush1.msra.mxu0 0.0
        %962 = vmatprep.subr.mxu0 0.0
        %963 = vmatpush1.msra.mxu0 0.0
        %964 = vmatprep.subr.mxu0 0.0
        %965 = vmatpush1.msra.mxu0 0.0
        %966 = vmatprep.subr.mxu0 0.0
        %967 = vmatpush1.msra.mxu0 0.0
        %968 = vmatprep.subr.mxu0 0.0
        %969 = vmatpush1.msra.mxu0 0.0
        %970 = vmatprep.subr.mxu0 0.0
        %971 = vmatpush1.msra.mxu0 0.0
        %972 = vmatprep.subr.mxu0 0.0
        %973 = vmatpush1.msra.mxu0 0.0
        %974 = vmatprep.subr.mxu0 0.0
        %975 = vmatpush1.msra.mxu0 0.0
        %976 = vmatprep.subr.mxu0 0.0
        %977 = vmatpush1.msra.mxu0 0.0
        %978 = vmatprep.subr.mxu0 0.0
        %979 = vmatpush1.msra.mxu0 0.0
        %980 = vmatprep.subr.mxu0 0.0
        %981 = vmatpush1.msra.mxu0 0.0
        %982 = vmatprep.subr.mxu0 0.0
        %983 = vmatpush1.msra.mxu0 0.0
        %984 = vmatprep.subr.mxu0 0.0
        %985 = vmatpush1.msra.mxu0 0.0
        %986 = vmatprep.subr.mxu0 0.0
        %987 = vmatpush1.msra.mxu0 0.0
        %988 = vmatprep.subr.mxu0 0.0
        %989 = vmatpush1.msra.mxu0 0.0
        %990 = vmatprep.subr.mxu0 0.0
        %991 = vmatpush1.msra.mxu0 0.0
        %992 = vmatprep.subr.mxu0 0.0
        %993 = vmatpush1.msra.mxu0 0.0
        %994 = vmatprep.subr.mxu0 0.0
        %995 = vmatpush1.msra.mxu0 0.0
        %996 = vmatprep.mubr.f32.mxu0 0.0
        %997 = vmatmul.mubr.f32.gmra.mrb[0].mxu0 %v930
        %v998 = vpop.f32.mrb[0].mxu0
        %v999 = vadd.f32 0.0, %v998
        %v1000 = vpop.f32.mrb[0].mxu0
        %1001 = vdwg.mxu0
        %v1002 = vrcp.pop %v928
        %v1003 = vmul.f32 %v999, %v1002
        %v1004 = vld [vmem:[%s8] sm:$0xff]
        %v1005 = vld [vmem:[#allocation2] sm:$0xff]
        %v1006 = vld [vmem:[#allocation3] sm:$0xff]
        %v1007 = vld [vmem:[#allocation4] sm:$0xff]
        %1009 = vrot.lane.b32.xlu0 %v1005, 120
        %v1010 = vpop.permute.xlu0 %1009
        %1012 = vrot.lane.b32.xlu0 %v1006, 120
        %v1013 = vpop.permute.xlu0 %1012
        %v1014 = vsel %vm843, %v1010, 0
        %v1016 = vsel %vm843, %v1013, 0
        %1018 = vmatprep.subr.mxu0 0.0
        %1019 = vmatpush1.xpose.msra.mxu0 %v1016
        %1020 = vmatprep.subr.mxu0 0.0
        %1021 = vmatpush1.xpose.msra.mxu0 0.0
        %1022 = vmatprep.subr.mxu0 0.0
        %1023 = vmatpush1.xpose.msra.mxu0 0.0
        %1024 = vmatprep.subr.mxu0 0.0
        %1025 = vmatpush1.xpose.msra.mxu0 0.0
        %1026 = vmatprep.subr.mxu0 0.0
        %1027 = vmatpush1.xpose.msra.mxu0 0.0
        %1028 = vmatprep.subr.mxu0 0.0
        %1029 = vmatpush1.xpose.msra.mxu0 0.0
        %1030 = vmatprep.subr.mxu0 0.0
        %1031 = vmatpush1.xpose.msra.mxu0 0.0
        %1032 = vmatprep.subr.mxu0 0.0
        %1033 = vmatpush1.xpose.msra.mxu0 0.0
        %1034 = vmatprep.subr.mxu0 0.0
        %1035 = vmatpush1.xpose.msra.mxu0 0.0
        %1036 = vmatprep.subr.mxu0 0.0
        %1037 = vmatpush1.xpose.msra.mxu0 0.0
        %1038 = vmatprep.subr.mxu0 0.0
        %1039 = vmatpush1.xpose.msra.mxu0 0.0
        %1040 = vmatprep.subr.mxu0 0.0
        %1041 = vmatpush1.xpose.msra.mxu0 0.0
        %1042 = vmatprep.subr.mxu0 0.0
        %1043 = vmatpush1.xpose.msra.mxu0 0.0
        %1044 = vmatprep.subr.mxu0 0.0
        %1045 = vmatpush1.xpose.msra.mxu0 0.0
        %1046 = vmatprep.subr.mxu0 0.0
        %1047 = vmatpush1.xpose.msra.mxu0 0.0
        %1048 = vmatprep.subr.mxu0 0.0
        %1049 = vmatpush1.xpose.msra.mxu0 0.0
        %1050 = vmatprep.subr.mxu0 0.0
        %1051 = vmatpush1.xpose.msra.mxu0 0.0
        %1052 = vmatprep.subr.mxu0 0.0
        %1053 = vmatpush1.xpose.msra.mxu0 0.0
        %1054 = vmatprep.subr.mxu0 0.0
        %1055 = vmatpush1.xpose.msra.mxu0 0.0
        %1056 = vmatprep.subr.mxu0 0.0
        %1057 = vmatpush1.xpose.msra.mxu0 0.0
        %1058 = vmatprep.subr.mxu0 0.0
        %1059 = vmatpush1.xpose.msra.mxu0 0.0
        %1060 = vmatprep.subr.mxu0 0.0
        %1061 = vmatpush1.xpose.msra.mxu0 0.0
        %1062 = vmatprep.subr.mxu0 0.0
        %1063 = vmatpush1.xpose.msra.mxu0 0.0
        %1064 = vmatprep.subr.mxu0 0.0
        %1065 = vmatpush1.xpose.msra.mxu0 0.0
        %1066 = vmatprep.subr.mxu0 0.0
        %1067 = vmatpush1.xpose.msra.mxu0 0.0
        %1068 = vmatprep.subr.mxu0 0.0
        %1069 = vmatpush1.xpose.msra.mxu0 0.0
        %1070 = vmatprep.subr.mxu0 0.0
        %1071 = vmatpush1.xpose.msra.mxu0 0.0
        %1072 = vmatprep.subr.mxu0 0.0
        %1073 = vmatpush1.xpose.msra.mxu0 0.0
        %1074 = vmatprep.subr.mxu0 0.0
        %1075 = vmatpush1.xpose.msra.mxu0 0.0
        %1076 = vmatprep.subr.mxu0 0.0
        %1077 = vmatpush1.xpose.msra.mxu0 0.0
        %1078 = vmatprep.subr.mxu0 0.0
        %1079 = vmatpush1.xpose.msra.mxu0 0.0
        %1080 = vmatprep.subr.mxu0 0.0
        %1081 = vmatpush1.xpose.msra.mxu0 0.0
        %1082 = vmatprep.mubr.f32.mxu0 0.0
        %1083 = vmatmul.mubr.f32.gmra.mrb[0].mxu0 %v1014
        %v1084 = vpop.f32.mrb[0].mxu0
        %v1085 = vadd.f32 %v839, %v1084
        %v1086 = vpop.f32.mrb[0].mxu0
        %1087 = vdwg.mxu0
        %v1088 = vsel %vm843, %v1085, -inf
        %1089 = vmax.xlane.f32.xlu0 %v1088
        %v1090 = vpop.xlane.xlu0 %1089
        %v1091 = vsub.f32 %v1085, %v1090
        %v1092 = vmul.f32 %v1091, 1.442695
        %v1093 = vpow.pop %v1092
        %v1094 = vsel %vm843, %v1093, 0.0
        %1095 = vadd.xlane.f32.xlu0 %v1094
        %v1096 = vpop.xlane.xlu0 %1095
        %1098 = vrot.lane.b32.xlu0 %v1007, 120
        %v1099 = vpop.permute.xlu0 %1098
        %v1102 = vsel %vm843, %v1093, 0
        %1104 = vmatprep.subr.mxu0 0.0
        %1105 = vmatpush1.msra.mxu0 %v1099
        %1106 = vmatprep.subr.mxu0 0.0
        %1107 = vmatpush1.msra.mxu0 0.0
        %1108 = vmatprep.subr.mxu0 0.0
        %1109 = vmatpush1.msra.mxu0 0.0
        %1110 = vmatprep.subr.mxu0 0.0
        %1111 = vmatpush1.msra.mxu0 0.0
        %1112 = vmatprep.subr.mxu0 0.0
        %1113 = vmatpush1.msra.mxu0 0.0
        %1114 = vmatprep.subr.mxu0 0.0
        %1115 = vmatpush1.msra.mxu0 0.0
        %1116 = vmatprep.subr.mxu0 0.0
        %1117 = vmatpush1.msra.mxu0 0.0
        %1118 = vmatprep.subr.mxu0 0.0
        %1119 = vmatpush1.msra.mxu0 0.0
        %1120 = vmatprep.subr.mxu0 0.0
        %1121 = vmatpush1.msra.mxu0 0.0
        %1122 = vmatprep.subr.mxu0 0.0
        %1123 = vmatpush1.msra.mxu0 0.0
        %1124 = vmatprep.subr.mxu0 0.0
        %1125 = vmatpush1.msra.mxu0 0.0
        %1126 = vmatprep.subr.mxu0 0.0
        %1127 = vmatpush1.msra.mxu0 0.0
        %1128 = vmatprep.subr.mxu0 0.0
        %1129 = vmatpush1.msra.mxu0 0.0
        %1130 = vmatprep.subr.mxu0 0.0
        %1131 = vmatpush1.msra.mxu0 0.0
        %1132 = vmatprep.subr.mxu0 0.0
        %1133 = vmatpush1.msra.mxu0 0.0
        %1134 = vmatprep.subr.mxu0 0.0
        %1135 = vmatpush1.msra.mxu0 0.0
        %1136 = vmatprep.subr.mxu0 0.0
        %1137 = vmatpush1.msra.mxu0 0.0
        %1138 = vmatprep.subr.mxu0 0.0
        %1139 = vmatpush1.msra.mxu0 0.0
        %1140 = vmatprep.subr.mxu0 0.0
        %1141 = vmatpush1.msra.mxu0 0.0
        %1142 = vmatprep.subr.mxu0 0.0
        %1143 = vmatpush1.msra.mxu0 0.0
        %1144 = vmatprep.subr.mxu0 0.0
        %1145 = vmatpush1.msra.mxu0 0.0
        %1146 = vmatprep.subr.mxu0 0.0
        %1147 = vmatpush1.msra.mxu0 0.0
        %1148 = vmatprep.subr.mxu0 0.0
        %1149 = vmatpush1.msra.mxu0 0.0
        %1150 = vmatprep.subr.mxu0 0.0
        %1151 = vmatpush1.msra.mxu0 0.0
        %1152 = vmatprep.subr.mxu0 0.0
        %1153 = vmatpush1.msra.mxu0 0.0
        %1154 = vmatprep.subr.mxu0 0.0
        %1155 = vmatpush1.msra.mxu0 0.0
        %1156 = vmatprep.subr.mxu0 0.0
        %1157 = vmatpush1.msra.mxu0 0.0
        %1158 = vmatprep.subr.mxu0 0.0
        %1159 = vmatpush1.msra.mxu0 0.0
        %1160 = vmatprep.subr.mxu0 0.0
        %1161 = vmatpush1.msra.mxu0 0.0
        %1162 = vmatprep.subr.mxu0 0.0
        %1163 = vmatpush1.msra.mxu0 0.0
        %1164 = vmatprep.subr.mxu0 0.0
        %1165 = vmatpush1.msra.mxu0 0.0
        %1166 = vmatprep.subr.mxu0 0.0
        %1167 = vmatpush1.msra.mxu0 0.0
        %1168 = vmatprep.mubr.f32.mxu0 0.0
        %1169 = vmatmul.mubr.f32.gmra.mrb[0].mxu0 %v1102
        %v1170 = vpop.f32.mrb[0].mxu0
        %v1171 = vadd.f32 0.0, %v1170
        %v1172 = vpop.f32.mrb[0].mxu0
        %1173 = vdwg.mxu0
        %v1174 = vrcp.pop %v1096
        %v1175 = vmul.f32 %v1171, %v1174
        %v1176 = vld [vmem:[%s8 + $0x8] sm:$0xff]
        %v1178 = vsel %vm843, %v1175, 0
        %1180 = vmatprep.subr.mxu0 0.0
        %1181 = vmatpush1.msra.mxu0 %v1176
        %1182 = vmatprep.subr.mxu0 0.0
        %1183 = vmatpush1.msra.mxu0 0.0
        %1184 = vmatprep.subr.mxu0 0.0
        %1185 = vmatpush1.msra.mxu0 0.0
        %1186 = vmatprep.subr.mxu0 0.0
        %1187 = vmatpush1.msra.mxu0 0.0
        %1188 = vmatprep.subr.mxu0 0.0
        %1189 = vmatpush1.msra.mxu0 0.0
        %1190 = vmatprep.subr.mxu0 0.0
        %1191 = vmatpush1.msra.mxu0 0.0
        %1192 = vmatprep.subr.mxu0 0.0
        %1193 = vmatpush1.msra.mxu0 0.0
        %1194 = vmatprep.subr.mxu0 0.0
        %1195 = vmatpush1.msra.mxu0 0.0
        %1196 = vmatprep.subr.mxu0 0.0
        %1197 = vmatpush1.msra.mxu0 0.0
        %1198 = vmatprep.subr.mxu0 0.0
        %1199 = vmatpush1.msra.mxu0 0.0
        %1200 = vmatprep.subr.mxu0 0.0
        %1201 = vmatpush1.msra.mxu0 0.0
        %1202 = vmatprep.subr.mxu0 0.0
        %1203 = vmatpush1.msra.mxu0 0.0
        %1204 = vmatprep.subr.mxu0 0.0
        %1205 = vmatpush1.msra.mxu0 0.0
        %1206 = vmatprep.subr.mxu0 0.0
        %1207 = vmatpush1.msra.mxu0 0.0
        %1208 = vmatprep.subr.mxu0 0.0
        %1209 = vmatpush1.msra.mxu0 0.0
        %1210 = vmatprep.subr.mxu0 0.0
        %1211 = vmatpush1.msra.mxu0 0.0
        %1212 = vmatprep.subr.mxu0 0.0
        %1213 = vmatpush1.msra.mxu0 0.0
        %1214 = vmatprep.subr.mxu0 0.0
        %1215 = vmatpush1.msra.mxu0 0.0
        %1216 = vmatprep.subr.mxu0 0.0
        %1217 = vmatpush1.msra.mxu0 0.0
        %1218 = vmatprep.subr.mxu0 0.0
        %1219 = vmatpush1.msra.mxu0 0.0
        %1220 = vmatprep.subr.mxu0 0.0
        %1221 = vmatpush1.msra.mxu0 0.0
        %1222 = vmatprep.subr.mxu0 0.0
        %1223 = vmatpush1.msra.mxu0 0.0
        %1224 = vmatprep.subr.mxu0 0.0
        %1225 = vmatpush1.msra.mxu0 0.0
        %1226 = vmatprep.subr.mxu0 0.0
        %1227 = vmatpush1.msra.mxu0 0.0
        %1228 = vmatprep.subr.mxu0 0.0
        %1229 = vmatpush1.msra.mxu0 0.0
        %1230 = vmatprep.subr.mxu0 0.0
        %1231 = vmatpush1.msra.mxu0 0.0
        %1232 = vmatprep.subr.mxu0 0.0
        %1233 = vmatpush1.msra.mxu0 0.0
        %1234 = vmatprep.subr.mxu0 0.0
        %1235 = vmatpush1.msra.mxu0 0.0
        %1236 = vmatprep.subr.mxu0 0.0
        %1237 = vmatpush1.msra.mxu0 0.0
        %1238 = vmatprep.subr.mxu0 0.0
        %1239 = vmatpush1.msra.mxu0 0.0
        %1240 = vmatprep.subr.mxu0 0.0
        %1241 = vmatpush1.msra.mxu0 0.0
        %1242 = vmatprep.subr.mxu0 0.0
        %1243 = vmatpush1.msra.mxu0 0.0
        %1244 = vmatprep.mubr.f32.mxu0 0.0
        %1245 = vmatmul.mubr.f32.gmra.mrb[0].mxu0 %v1178
        %v1246 = vpop.f32.mrb[0].mxu0
        %v1247 = vadd.f32 0.0, %v1246
        %v1248 = vpop.f32.mrb[0].mxu0
        %1249 = vdwg.mxu0
        %v1251 = vsel %vm843, %v1003, 0
        %1253 = vmatprep.subr.mxu0 0.0
        %1254 = vmatpush1.msra.mxu0 %v1004
        %1255 = vmatprep.subr.mxu0 0.0
        %1256 = vmatpush1.msra.mxu0 0.0
        %1257 = vmatprep.subr.mxu0 0.0
        %1258 = vmatpush1.msra.mxu0 0.0
        %1259 = vmatprep.subr.mxu0 0.0
        %1260 = vmatpush1.msra.mxu0 0.0
        %1261 = vmatprep.subr.mxu0 0.0
        %1262 = vmatpush1.msra.mxu0 0.0
        %1263 = vmatprep.subr.mxu0 0.0
        %1264 = vmatpush1.msra.mxu0 0.0
        %1265 = vmatprep.subr.mxu0 0.0
        %1266 = vmatpush1.msra.mxu0 0.0
        %1267 = vmatprep.subr.mxu0 0.0
        %1268 = vmatpush1.msra.mxu0 0.0
        %1269 = vmatprep.subr.mxu0 0.0
        %1270 = vmatpush1.msra.mxu0 0.0
        %1271 = vmatprep.subr.mxu0 0.0
        %1272 = vmatpush1.msra.mxu0 0.0
        %1273 = vmatprep.subr.mxu0 0.0
        %1274 = vmatpush1.msra.mxu0 0.0
        %1275 = vmatprep.subr.mxu0 0.0
        %1276 = vmatpush1.msra.mxu0 0.0
        %1277 = vmatprep.subr.mxu0 0.0
        %1278 = vmatpush1.msra.mxu0 0.0
        %1279 = vmatprep.subr.mxu0 0.0
        %1280 = vmatpush1.msra.mxu0 0.0
        %1281 = vmatprep.subr.mxu0 0.0
        %1282 = vmatpush1.msra.mxu0 0.0
        %1283 = vmatprep.subr.mxu0 0.0
        %1284 = vmatpush1.msra.mxu0 0.0
        %1285 = vmatprep.subr.mxu0 0.0
        %1286 = vmatpush1.msra.mxu0 0.0
        %1287 = vmatprep.subr.mxu0 0.0
        %1288 = vmatpush1.msra.mxu0 0.0
        %1289 = vmatprep.subr.mxu0 0.0
        %1290 = vmatpush1.msra.mxu0 0.0
        %1291 = vmatprep.subr.mxu0 0.0
        %1292 = vmatpush1.msra.mxu0 0.0
        %1293 = vmatprep.subr.mxu0 0.0
        %1294 = vmatpush1.msra.mxu0 0.0
        %1295 = vmatprep.subr.mxu0 0.0
        %1296 = vmatpush1.msra.mxu0 0.0
        %1297 = vmatprep.subr.mxu0 0.0
        %1298 = vmatpush1.msra.mxu0 0.0
        %1299 = vmatprep.subr.mxu0 0.0
        %1300 = vmatpush1.msra.mxu0 0.0
        %1301 = vmatprep.subr.mxu0 0.0
        %1302 = vmatpush1.msra.mxu0 0.0
        %1303 = vmatprep.subr.mxu0 0.0
        %1304 = vmatpush1.msra.mxu0 0.0
        %1305 = vmatprep.subr.mxu0 0.0
        %1306 = vmatpush1.msra.mxu0 0.0
        %1307 = vmatprep.subr.mxu0 0.0
        %1308 = vmatpush1.msra.mxu0 0.0
        %1309 = vmatprep.subr.mxu0 0.0
        %1310 = vmatpush1.msra.mxu0 0.0
        %1311 = vmatprep.subr.mxu0 0.0
        %1312 = vmatpush1.msra.mxu0 0.0
        %1313 = vmatprep.subr.mxu0 0.0
        %1314 = vmatpush1.msra.mxu0 0.0
        %1315 = vmatprep.subr.mxu0 0.0
        %1316 = vmatpush1.msra.mxu0 0.0
        %1317 = vmatprep.mubr.f32.mxu0 0.0
        %1318 = vmatmul.mubr.f32.gmra.mrb[0].mxu0 %v1251
        %v1319 = vpop.f32.mrb[0].mxu0
        %v1320 = vadd.f32 %v1247, %v1319
        %v1321 = vpop.f32.mrb[0].mxu0
        %1322 = vdwg.mxu0
        %v1323 = vld [vmem:[#allocation2] sm:$0xff]
        %v1324 = vld [vmem:[#allocation3] sm:$0xff]
        %v1325 = vld [vmem:[#allocation4] sm:$0xff]
        %1327 = vrot.lane.b32.xlu0 %v1323, 112
        %v1328 = vpop.permute.xlu0 %1327
        %1330 = vrot.lane.b32.xlu0 %v1324, 112
        %v1331 = vpop.permute.xlu0 %1330
        %v1332 = vsel %vm843, %v1328, 0
        %v1334 = vsel %vm843, %v1331, 0
        %1336 = vmatprep.subr.mxu0 0.0
        %1337 = vmatpush1.xpose.msra.mxu0 %v1334
        %1338 = vmatprep.subr.mxu0 0.0
        %1339 = vmatpush1.xpose.msra.mxu0 0.0
        %1340 = vmatprep.subr.mxu0 0.0
        %1341 = vmatpush1.xpose.msra.mxu0 0.0
        %1342 = vmatprep.subr.mxu0 0.0
        %1343 = vmatpush1.xpose.msra.mxu0 0.0
        %1344 = vmatprep.subr.mxu0 0.0
        %1345 = vmatpush1.xpose.msra.mxu0 0.0
        %1346 = vmatprep.subr.mxu0 0.0
        %1347 = vmatpush1.xpose.msra.mxu0 0.0
        %1348 = vmatprep.subr.mxu0 0.0
        %1349 = vmatpush1.xpose.msra.mxu0 0.0
        %1350 = vmatprep.subr.mxu0 0.0
        %1351 = vmatpush1.xpose.msra.mxu0 0.0
        %1352 = vmatprep.subr.mxu0 0.0
        %1353 = vmatpush1.xpose.msra.mxu0 0.0
        %1354 = vmatprep.subr.mxu0 0.0
        %1355 = vmatpush1.xpose.msra.mxu0 0.0
        %1356 = vmatprep.subr.mxu0 0.0
        %1357 = vmatpush1.xpose.msra.mxu0 0.0
        %1358 = vmatprep.subr.mxu0 0.0
        %1359 = vmatpush1.xpose.msra.mxu0 0.0
        %1360 = vmatprep.subr.mxu0 0.0
        %1361 = vmatpush1.xpose.msra.mxu0 0.0
        %1362 = vmatprep.subr.mxu0 0.0
        %1363 = vmatpush1.xpose.msra.mxu0 0.0
        %1364 = vmatprep.subr.mxu0 0.0
        %1365 = vmatpush1.xpose.msra.mxu0 0.0
        %1366 = vmatprep.subr.mxu0 0.0
        %1367 = vmatpush1.xpose.msra.mxu0 0.0
        %1368 = vmatprep.subr.mxu0 0.0
        %1369 = vmatpush1.xpose.msra.mxu0 0.0
        %1370 = vmatprep.subr.mxu0 0.0
        %1371 = vmatpush1.xpose.msra.mxu0 0.0
        %1372 = vmatprep.subr.mxu0 0.0
        %1373 = vmatpush1.xpose.msra.mxu0 0.0
        %1374 = vmatprep.subr.mxu0 0.0
        %1375 = vmatpush1.xpose.msra.mxu0 0.0
        %1376 = vmatprep.subr.mxu0 0.0
        %1377 = vmatpush1.xpose.msra.mxu0 0.0
        %1378 = vmatprep.subr.mxu0 0.0
        %1379 = vmatpush1.xpose.msra.mxu0 0.0
        %1380 = vmatprep.subr.mxu0 0.0
        %1381 = vmatpush1.xpose.msra.mxu0 0.0
        %1382 = vmatprep.subr.mxu0 0.0
        %1383 = vmatpush1.xpose.msra.mxu0 0.0
        %1384 = vmatprep.subr.mxu0 0.0
        %1385 = vmatpush1.xpose.msra.mxu0 0.0
        %1386 = vmatprep.subr.mxu0 0.0
        %1387 = vmatpush1.xpose.msra.mxu0 0.0
        %1388 = vmatprep.subr.mxu0 0.0
        %1389 = vmatpush1.xpose.msra.mxu0 0.0
        %1390 = vmatprep.subr.mxu0 0.0
        %1391 = vmatpush1.xpose.msra.mxu0 0.0
        %1392 = vmatprep.subr.mxu0 0.0
        %1393 = vmatpush1.xpose.msra.mxu0 0.0
        %1394 = vmatprep.subr.mxu0 0.0
        %1395 = vmatpush1.xpose.msra.mxu0 0.0
        %1396 = vmatprep.subr.mxu0 0.0
        %1397 = vmatpush1.xpose.msra.mxu0 0.0
        %1398 = vmatprep.subr.mxu0 0.0
        %1399 = vmatpush1.xpose.msra.mxu0 0.0
        %1400 = vmatprep.mubr.f32.mxu0 0.0
        %1401 = vmatmul.mubr.f32.gmra.mrb[0].mxu0 %v1332
        %v1402 = vpop.f32.mrb[0].mxu0
        %v1403 = vadd.f32 %v839, %v1402
        %v1404 = vpop.f32.mrb[0].mxu0
        %1405 = vdwg.mxu0
        %v1406 = vsel %vm843, %v1403, -inf
        %1407 = vmax.xlane.f32.xlu0 %v1406
        %v1408 = vpop.xlane.xlu0 %1407
        %v1409 = vsub.f32 %v1403, %v1408
        %v1410 = vmul.f32 %v1409, 1.442695
        %v1411 = vpow.pop %v1410
        %v1412 = vsel %vm843, %v1411, 0.0
        %1413 = vadd.xlane.f32.xlu0 %v1412
        %v1414 = vpop.xlane.xlu0 %1413
        %1416 = vrot.lane.b32.xlu0 %v1325, 112
        %v1417 = vpop.permute.xlu0 %1416
        %v1420 = vsel %vm843, %v1411, 0
        %1422 = vmatprep.subr.mxu0 0.0
        %1423 = vmatpush1.msra.mxu0 %v1417
        %1424 = vmatprep.subr.mxu0 0.0
        %1425 = vmatpush1.msra.mxu0 0.0
        %1426 = vmatprep.subr.mxu0 0.0
        %1427 = vmatpush1.msra.mxu0 0.0
        %1428 = vmatprep.subr.mxu0 0.0
        %1429 = vmatpush1.msra.mxu0 0.0
        %1430 = vmatprep.subr.mxu0 0.0
        %1431 = vmatpush1.msra.mxu0 0.0
        %1432 = vmatprep.subr.mxu0 0.0
        %1433 = vmatpush1.msra.mxu0 0.0
        %1434 = vmatprep.subr.mxu0 0.0
        %1435 = vmatpush1.msra.mxu0 0.0
        %1436 = vmatprep.subr.mxu0 0.0
        %1437 = vmatpush1.msra.mxu0 0.0
        %1438 = vmatprep.subr.mxu0 0.0
        %1439 = vmatpush1.msra.mxu0 0.0
        %1440 = vmatprep.subr.mxu0 0.0
        %1441 = vmatpush1.msra.mxu0 0.0
        %1442 = vmatprep.subr.mxu0 0.0
        %1443 = vmatpush1.msra.mxu0 0.0
        %1444 = vmatprep.subr.mxu0 0.0
        %1445 = vmatpush1.msra.mxu0 0.0
        %1446 = vmatprep.subr.mxu0 0.0
        %1447 = vmatpush1.msra.mxu0 0.0
        %1448 = vmatprep.subr.mxu0 0.0
        %1449 = vmatpush1.msra.mxu0 0.0
        %1450 = vmatprep.subr.mxu0 0.0
        %1451 = vmatpush1.msra.mxu0 0.0
        %1452 = vmatprep.subr.mxu0 0.0
        %1453 = vmatpush1.msra.mxu0 0.0
        %1454 = vmatprep.subr.mxu0 0.0
        %1455 = vmatpush1.msra.mxu0 0.0
        %1456 = vmatprep.subr.mxu0 0.0
        %1457 = vmatpush1.msra.mxu0 0.0
        %1458 = vmatprep.subr.mxu0 0.0
        %1459 = vmatpush1.msra.mxu0 0.0
        %1460 = vmatprep.subr.mxu0 0.0
        %1461 = vmatpush1.msra.mxu0 0.0
        %1462 = vmatprep.subr.mxu0 0.0
        %1463 = vmatpush1.msra.mxu0 0.0
        %1464 = vmatprep.subr.mxu0 0.0
        %1465 = vmatpush1.msra.mxu0 0.0
        %1466 = vmatprep.subr.mxu0 0.0
        %1467 = vmatpush1.msra.mxu0 0.0
        %1468 = vmatprep.subr.mxu0 0.0
        %1469 = vmatpush1.msra.mxu0 0.0
        %1470 = vmatprep.subr.mxu0 0.0
        %1471 = vmatpush1.msra.mxu0 0.0
        %1472 = vmatprep.subr.mxu0 0.0
        %1473 = vmatpush1.msra.mxu0 0.0
        %1474 = vmatprep.subr.mxu0 0.0
        %1475 = vmatpush1.msra.mxu0 0.0
        %1476 = vmatprep.subr.mxu0 0.0
        %1477 = vmatpush1.msra.mxu0 0.0
        %1478 = vmatprep.subr.mxu0 0.0
        %1479 = vmatpush1.msra.mxu0 0.0
        %1480 = vmatprep.subr.mxu0 0.0
        %1481 = vmatpush1.msra.mxu0 0.0
        %1482 = vmatprep.subr.mxu0 0.0
        %1483 = vmatpush1.msra.mxu0 0.0
        %1484 = vmatprep.subr.mxu0 0.0
        %1485 = vmatpush1.msra.mxu0 0.0
        %1486 = vmatprep.mubr.f32.mxu0 0.0
        %1487 = vmatmul.mubr.f32.gmra.mrb[0].mxu0 %v1420
        %v1488 = vpop.f32.mrb[0].mxu0
        %v1489 = vadd.f32 0.0, %v1488
        %v1490 = vpop.f32.mrb[0].mxu0
        %1491 = vdwg.mxu0
        %v1492 = vrcp.pop %v1414
        %v1493 = vmul.f32 %v1489, %v1492
        %v1494 = vld [vmem:[%s8 + $0x10] sm:$0xff]
        %v1496 = vsel %vm843, %v1493, 0
        %1498 = vmatprep.subr.mxu0 0.0
        %1499 = vmatpush1.msra.mxu0 %v1494
        %1500 = vmatprep.subr.mxu0 0.0
        %1501 = vmatpush1.msra.mxu0 0.0
        %1502 = vmatprep.subr.mxu0 0.0
        %1503 = vmatpush1.msra.mxu0 0.0
        %1504 = vmatprep.subr.mxu0 0.0
        %1505 = vmatpush1.msra.mxu0 0.0
        %1506 = vmatprep.subr.mxu0 0.0
        %1507 = vmatpush1.msra.mxu0 0.0
        %1508 = vmatprep.subr.mxu0 0.0
        %1509 = vmatpush1.msra.mxu0 0.0
        %1510 = vmatprep.subr.mxu0 0.0
        %1511 = vmatpush1.msra.mxu0 0.0
        %1512 = vmatprep.subr.mxu0 0.0
        %1513 = vmatpush1.msra.mxu0 0.0
        %1514 = vmatprep.subr.mxu0 0.0
        %1515 = vmatpush1.msra.mxu0 0.0
        %1516 = vmatprep.subr.mxu0 0.0
        %1517 = vmatpush1.msra.mxu0 0.0
        %1518 = vmatprep.subr.mxu0 0.0
        %1519 = vmatpush1.msra.mxu0 0.0
        %1520 = vmatprep.subr.mxu0 0.0
        %1521 = vmatpush1.msra.mxu0 0.0
        %1522 = vmatprep.subr.mxu0 0.0
        %1523 = vmatpush1.msra.mxu0 0.0
        %1524 = vmatprep.subr.mxu0 0.0
        %1525 = vmatpush1.msra.mxu0 0.0
        %1526 = vmatprep.subr.mxu0 0.0
        %1527 = vmatpush1.msra.mxu0 0.0
        %1528 = vmatprep.subr.mxu0 0.0
        %1529 = vmatpush1.msra.mxu0 0.0
        %1530 = vmatprep.subr.mxu0 0.0
        %1531 = vmatpush1.msra.mxu0 0.0
        %1532 = vmatprep.subr.mxu0 0.0
        %1533 = vmatpush1.msra.mxu0 0.0
        %1534 = vmatprep.subr.mxu0 0.0
        %1535 = vmatpush1.msra.mxu0 0.0
        %1536 = vmatprep.subr.mxu0 0.0
        %1537 = vmatpush1.msra.mxu0 0.0
        %1538 = vmatprep.subr.mxu0 0.0
        %1539 = vmatpush1.msra.mxu0 0.0
        %1540 = vmatprep.subr.mxu0 0.0
        %1541 = vmatpush1.msra.mxu0 0.0
        %1542 = vmatprep.subr.mxu0 0.0
        %1543 = vmatpush1.msra.mxu0 0.0
        %1544 = vmatprep.subr.mxu0 0.0
        %1545 = vmatpush1.msra.mxu0 0.0
        %1546 = vmatprep.subr.mxu0 0.0
        %1547 = vmatpush1.msra.mxu0 0.0
        %1548 = vmatprep.subr.mxu0 0.0
        %1549 = vmatpush1.msra.mxu0 0.0
        %1550 = vmatprep.subr.mxu0 0.0
        %1551 = vmatpush1.msra.mxu0 0.0
        %1552 = vmatprep.subr.mxu0 0.0
        %1553 = vmatpush1.msra.mxu0 0.0
        %1554 = vmatprep.subr.mxu0 0.0
        %1555 = vmatpush1.msra.mxu0 0.0
        %1556 = vmatprep.subr.mxu0 0.0
        %1557 = vmatpush1.msra.mxu0 0.0
        %1558 = vmatprep.subr.mxu0 0.0
        %1559 = vmatpush1.msra.mxu0 0.0
        %1560 = vmatprep.subr.mxu0 0.0
        %1561 = vmatpush1.msra.mxu0 0.0
        %1562 = vmatprep.mubr.f32.mxu0 0.0
        %1563 = vmatmul.mubr.f32.gmra.mrb[0].mxu0 %v1496
        %v1564 = vpop.f32.mrb[0].mxu0
        %v1565 = vadd.f32 0.0, %v1564
        %v1566 = vpop.f32.mrb[0].mxu0
        %1567 = vdwg.mxu0
        %v1568 = vadd.f32 %v1320, %v1565
        %v1569 = vld [vmem:[#allocation2] sm:$0xff]
        %v1570 = vld [vmem:[#allocation3] sm:$0xff]
        %v1571 = vld [vmem:[#allocation4] sm:$0xff]
        %1573 = vrot.lane.b32.xlu0 %v1569, 104
        %v1574 = vpop.permute.xlu0 %1573
        %1576 = vrot.lane.b32.xlu0 %v1570, 104
        %v1577 = vpop.permute.xlu0 %1576
        %v1578 = vsel %vm843, %v1574, 0
        %v1580 = vsel %vm843, %v1577, 0
        %1582 = vmatprep.subr.mxu0 0.0
        %1583 = vmatpush1.xpose.msra.mxu0 %v1580
        %1584 = vmatprep.subr.mxu0 0.0
        %1585 = vmatpush1.xpose.msra.mxu0 0.0
        %1586 = vmatprep.subr.mxu0 0.0
        %1587 = vmatpush1.xpose.msra.mxu0 0.0
        %1588 = vmatprep.subr.mxu0 0.0
        %1589 = vmatpush1.xpose.msra.mxu0 0.0
        %1590 = vmatprep.subr.mxu0 0.0
        %1591 = vmatpush1.xpose.msra.mxu0 0.0
        %1592 = vmatprep.subr.mxu0 0.0
        %1593 = vmatpush1.xpose.msra.mxu0 0.0
        %1594 = vmatprep.subr.mxu0 0.0
        %1595 = vmatpush1.xpose.msra.mxu0 0.0
        %1596 = vmatprep.subr.mxu0 0.0
        %1597 = vmatpush1.xpose.msra.mxu0 0.0
        %1598 = vmatprep.subr.mxu0 0.0
        %1599 = vmatpush1.xpose.msra.mxu0 0.0
        %1600 = vmatprep.subr.mxu0 0.0
        %1601 = vmatpush1.xpose.msra.mxu0 0.0
        %1602 = vmatprep.subr.mxu0 0.0
        %1603 = vmatpush1.xpose.msra.mxu0 0.0
        %1604 = vmatprep.subr.mxu0 0.0
        %1605 = vmatpush1.xpose.msra.mxu0 0.0
        %1606 = vmatprep.subr.mxu0 0.0
        %1607 = vmatpush1.xpose.msra.mxu0 0.0
        %1608 = vmatprep.subr.mxu0 0.0
        %1609 = vmatpush1.xpose.msra.mxu0 0.0
        %1610 = vmatprep.subr.mxu0 0.0
        %1611 = vmatpush1.xpose.msra.mxu0 0.0
        %1612 = vmatprep.subr.mxu0 0.0
        %1613 = vmatpush1.xpose.msra.mxu0 0.0
        %1614 = vmatprep.subr.mxu0 0.0
        %1615 = vmatpush1.xpose.msra.mxu0 0.0
        %1616 = vmatprep.subr.mxu0 0.0
        %1617 = vmatpush1.xpose.msra.mxu0 0.0
        %1618 = vmatprep.subr.mxu0 0.0
        %1619 = vmatpush1.xpose.msra.mxu0 0.0
        %1620 = vmatprep.subr.mxu0 0.0
        %1621 = vmatpush1.xpose.msra.mxu0 0.0
        %1622 = vmatprep.subr.mxu0 0.0
        %1623 = vmatpush1.xpose.msra.mxu0 0.0
        %1624 = vmatprep.subr.mxu0 0.0
        %1625 = vmatpush1.xpose.msra.mxu0 0.0
        %1626 = vmatprep.subr.mxu0 0.0
        %1627 = vmatpush1.xpose.msra.mxu0 0.0
        %1628 = vmatprep.subr.mxu0 0.0
        %1629 = vmatpush1.xpose.msra.mxu0 0.0
        %1630 = vmatprep.subr.mxu0 0.0
        %1631 = vmatpush1.xpose.msra.mxu0 0.0
        %1632 = vmatprep.subr.mxu0 0.0
        %1633 = vmatpush1.xpose.msra.mxu0 0.0
        %1634 = vmatprep.subr.mxu0 0.0
        %1635 = vmatpush1.xpose.msra.mxu0 0.0
        %1636 = vmatprep.subr.mxu0 0.0
        %1637 = vmatpush1.xpose.msra.mxu0 0.0
        %1638 = vmatprep.subr.mxu0 0.0
        %1639 = vmatpush1.xpose.msra.mxu0 0.0
        %1640 = vmatprep.subr.mxu0 0.0
        %1641 = vmatpush1.xpose.msra.mxu0 0.0
        %1642 = vmatprep.subr.mxu0 0.0
        %1643 = vmatpush1.xpose.msra.mxu0 0.0
        %1644 = vmatprep.subr.mxu0 0.0
        %1645 = vmatpush1.xpose.msra.mxu0 0.0
        %1646 = vmatprep.mubr.f32.mxu0 0.0
        %1647 = vmatmul.mubr.f32.gmra.mrb[0].mxu0 %v1578
        %v1648 = vpop.f32.mrb[0].mxu0
        %v1649 = vadd.f32 %v839, %v1648
        %v1650 = vpop.f32.mrb[0].mxu0
        %1651 = vdwg.mxu0
        %v1652 = vsel %vm843, %v1649, -inf
        %1653 = vmax.xlane.f32.xlu0 %v1652
        %v1654 = vpop.xlane.xlu0 %1653
        %v1655 = vsub.f32 %v1649, %v1654
        %v1656 = vmul.f32 %v1655, 1.442695
        %v1657 = vpow.pop %v1656
        %v1658 = vsel %vm843, %v1657, 0.0
        %1659 = vadd.xlane.f32.xlu0 %v1658
        %v1660 = vpop.xlane.xlu0 %1659
        %1662 = vrot.lane.b32.xlu0 %v1571, 104
        %v1663 = vpop.permute.xlu0 %1662
        %v1666 = vsel %vm843, %v1657, 0
        %1668 = vmatprep.subr.mxu0 0.0
        %1669 = vmatpush1.msra.mxu0 %v1663
        %1670 = vmatprep.subr.mxu0 0.0
        %1671 = vmatpush1.msra.mxu0 0.0
        %1672 = vmatprep.subr.mxu0 0.0
        %1673 = vmatpush1.msra.mxu0 0.0
        %1674 = vmatprep.subr.mxu0 0.0
        %1675 = vmatpush1.msra.mxu0 0.0
        %1676 = vmatprep.subr.mxu0 0.0
        %1677 = vmatpush1.msra.mxu0 0.0
        %1678 = vmatprep.subr.mxu0 0.0
        %1679 = vmatpush1.msra.mxu0 0.0
        %1680 = vmatprep.subr.mxu0 0.0
        %1681 = vmatpush1.msra.mxu0 0.0
        %1682 = vmatprep.subr.mxu0 0.0
        %1683 = vmatpush1.msra.mxu0 0.0
        %1684 = vmatprep.subr.mxu0 0.0
        %1685 = vmatpush1.msra.mxu0 0.0
        %1686 = vmatprep.subr.mxu0 0.0
        %1687 = vmatpush1.msra.mxu0 0.0
        %1688 = vmatprep.subr.mxu0 0.0
        %1689 = vmatpush1.msra.mxu0 0.0
        %1690 = vmatprep.subr.mxu0 0.0
        %1691 = vmatpush1.msra.mxu0 0.0
        %1692 = vmatprep.subr.mxu0 0.0
        %1693 = vmatpush1.msra.mxu0 0.0
        %1694 = vmatprep.subr.mxu0 0.0
        %1695 = vmatpush1.msra.mxu0 0.0
        %1696 = vmatprep.subr.mxu0 0.0
        %1697 = vmatpush1.msra.mxu0 0.0
        %1698 = vmatprep.subr.mxu0 0.0
        %1699 = vmatpush1.msra.mxu0 0.0
        %1700 = vmatprep.subr.mxu0 0.0
        %1701 = vmatpush1.msra.mxu0 0.0
        %1702 = vmatprep.subr.mxu0 0.0
        %1703 = vmatpush1.msra.mxu0 0.0
        %1704 = vmatprep.subr.mxu0 0.0
        %1705 = vmatpush1.msra.mxu0 0.0
        %1706 = vmatprep.subr.mxu0 0.0
        %1707 = vmatpush1.msra.mxu0 0.0
        %1708 = vmatprep.subr.mxu0 0.0
        %1709 = vmatpush1.msra.mxu0 0.0
        %1710 = vmatprep.subr.mxu0 0.0
        %1711 = vmatpush1.msra.mxu0 0.0
        %1712 = vmatprep.subr.mxu0 0.0
        %1713 = vmatpush1.msra.mxu0 0.0
        %1714 = vmatprep.subr.mxu0 0.0
        %1715 = vmatpush1.msra.mxu0 0.0
        %1716 = vmatprep.subr.mxu0 0.0
        %1717 = vmatpush1.msra.mxu0 0.0
        %1718 = vmatprep.subr.mxu0 0.0
        %1719 = vmatpush1.msra.mxu0 0.0
        %1720 = vmatprep.subr.mxu0 0.0
        %1721 = vmatpush1.msra.mxu0 0.0
        %1722 = vmatprep.subr.mxu0 0.0
        %1723 = vmatpush1.msra.mxu0 0.0
        %1724 = vmatprep.subr.mxu0 0.0
        %1725 = vmatpush1.msra.mxu0 0.0
        %1726 = vmatprep.subr.mxu0 0.0
        %1727 = vmatpush1.msra.mxu0 0.0
        %1728 = vmatprep.subr.mxu0 0.0
        %1729 = vmatpush1.msra.mxu0 0.0
        %1730 = vmatprep.subr.mxu0 0.0
        %1731 = vmatpush1.msra.mxu0 0.0
        %1732 = vmatprep.mubr.f32.mxu0 0.0
        %1733 = vmatmul.mubr.f32.gmra.mrb[0].mxu0 %v1666
        %v1734 = vpop.f32.mrb[0].mxu0
        %v1735 = vadd.f32 0.0, %v1734
        %v1736 = vpop.f32.mrb[0].mxu0
        %1737 = vdwg.mxu0
        %v1738 = vrcp.pop %v1660
        %v1739 = vmul.f32 %v1735, %v1738
        %v1740 = vld [vmem:[%s8 + $0x18] sm:$0xff]
        %v1742 = vsel %vm843, %v1739, 0
        %1744 = vmatprep.subr.mxu0 0.0
        %1745 = vmatpush1.msra.mxu0 %v1740
        %1746 = vmatprep.subr.mxu0 0.0
        %1747 = vmatpush1.msra.mxu0 0.0
        %1748 = vmatprep.subr.mxu0 0.0
        %1749 = vmatpush1.msra.mxu0 0.0
        %1750 = vmatprep.subr.mxu0 0.0
        %1751 = vmatpush1.msra.mxu0 0.0
        %1752 = vmatprep.subr.mxu0 0.0
        %1753 = vmatpush1.msra.mxu0 0.0
        %1754 = vmatprep.subr.mxu0 0.0
        %1755 = vmatpush1.msra.mxu0 0.0
        %1756 = vmatprep.subr.mxu0 0.0
        %1757 = vmatpush1.msra.mxu0 0.0
        %1758 = vmatprep.subr.mxu0 0.0
        %1759 = vmatpush1.msra.mxu0 0.0
        %1760 = vmatprep.subr.mxu0 0.0
        %1761 = vmatpush1.msra.mxu0 0.0
        %1762 = vmatprep.subr.mxu0 0.0
        %1763 = vmatpush1.msra.mxu0 0.0
        %1764 = vmatprep.subr.mxu0 0.0
        %1765 = vmatpush1.msra.mxu0 0.0
        %1766 = vmatprep.subr.mxu0 0.0
        %1767 = vmatpush1.msra.mxu0 0.0
        %1768 = vmatprep.subr.mxu0 0.0
        %1769 = vmatpush1.msra.mxu0 0.0
        %1770 = vmatprep.subr.mxu0 0.0
        %1771 = vmatpush1.msra.mxu0 0.0
        %1772 = vmatprep.subr.mxu0 0.0
        %1773 = vmatpush1.msra.mxu0 0.0
        %1774 = vmatprep.subr.mxu0 0.0
        %1775 = vmatpush1.msra.mxu0 0.0
        %1776 = vmatprep.subr.mxu0 0.0
        %1777 = vmatpush1.msra.mxu0 0.0
        %1778 = vmatprep.subr.mxu0 0.0
        %1779 = vmatpush1.msra.mxu0 0.0
        %1780 = vmatprep.subr.mxu0 0.0
        %1781 = vmatpush1.msra.mxu0 0.0
        %1782 = vmatprep.subr.mxu0 0.0
        %1783 = vmatpush1.msra.mxu0 0.0
        %1784 = vmatprep.subr.mxu0 0.0
        %1785 = vmatpush1.msra.mxu0 0.0
        %1786 = vmatprep.subr.mxu0 0.0
        %1787 = vmatpush1.msra.mxu0 0.0
        %1788 = vmatprep.subr.mxu0 0.0
        %1789 = vmatpush1.msra.mxu0 0.0
        %1790 = vmatprep.subr.mxu0 0.0
        %1791 = vmatpush1.msra.mxu0 0.0
        %1792 = vmatprep.subr.mxu0 0.0
        %1793 = vmatpush1.msra.mxu0 0.0
        %1794 = vmatprep.subr.mxu0 0.0
        %1795 = vmatpush1.msra.mxu0 0.0
        %1796 = vmatprep.subr.mxu0 0.0
        %1797 = vmatpush1.msra.mxu0 0.0
        %1798 = vmatprep.subr.mxu0 0.0
        %1799 = vmatpush1.msra.mxu0 0.0
        %1800 = vmatprep.subr.mxu0 0.0
        %1801 = vmatpush1.msra.mxu0 0.0
        %1802 = vmatprep.subr.mxu0 0.0
        %1803 = vmatpush1.msra.mxu0 0.0
        %1804 = vmatprep.subr.mxu0 0.0
        %1805 = vmatpush1.msra.mxu0 0.0
        %1806 = vmatprep.subr.mxu0 0.0
        %1807 = vmatpush1.msra.mxu0 0.0
        %1808 = vmatprep.mubr.f32.mxu0 0.0
        %1809 = vmatmul.mubr.f32.gmra.mrb[0].mxu0 %v1742
        %v1810 = vpop.f32.mrb[0].mxu0
        %v1811 = vadd.f32 0.0, %v1810
        %v1812 = vpop.f32.mrb[0].mxu0
        %1813 = vdwg.mxu0
        %v1814 = vadd.f32 %v1568, %v1811
        %v1815 = vld [vmem:[%s9] sm:$0x1]
        %v1817 = vlaneseq
        %v1818 = vshrl.u32 %v1817, 7
        %v1819 = vsub.s32 0, %v1818
        %v1820 = vrot.slane %v1815, %v1819
        %v1822 = vadd.f32 %v1814, %v1820
        %v1823 = vld [vmem:[%s10] sm:$0x1]
        %v1824 = vld [vmem:[%s11] sm:$0x1]
        %v1825 = vsel %vm600, %v1822, 0.0
        %1826 = vadd.xlane.f32.xlu0 %v1825
        %v1827 = vpop.xlane.xlu0 %1826
        %v1828 = vrcp.pop 32.0
        %v1829 = vmul.f32 %v1827, %v1828
        %v1830 = vsub.f32 %v1822, %v1829
        %v1831 = vmul.f32 %v1830, %v1830
        %v1832 = vsel %vm600, %v1831, 0.0
        %1833 = vadd.xlane.f32.xlu0 %v1832
        %v1834 = vpop.xlane.xlu0 %1833
        %v1835 = vmul.f32 %v1834, %v1828
        %v1836 = vadd.f32 %v1835, 1e-06
        %v1837 = vrsqrt.pop %v1836
        %v1838 = vmul.f32 %v1830, %v1837
        %v1840 = vlaneseq
        %v1841 = vshrl.u32 %v1840, 7
        %v1842 = vsub.s32 0, %v1841
        %v1843 = vrot.slane %v1823, %v1842
        %v1845 = vmul.f32 %v1838, %v1843
        %v1847 = vlaneseq
        %v1848 = vshrl.u32 %v1847, 7
        %v1849 = vsub.s32 0, %v1848
        %v1850 = vrot.slane %v1824, %v1849
        %v1852 = vadd.f32 %v1845, %v1850
        %v1853 = vadd.f32 %v588, %v1852
        %v1854 = vld [vmem:[%s12] sm:$0xff]
        %v1855 = vld [vmem:[%s12 + $0x8] sm:$0xff]
        %v1856 = vld [vmem:[%s12 + $0x10] sm:$0xff]
        %v1857 = vld [vmem:[%s12 + $0x18] sm:$0xff]
        %v1858 = vld [vmem:[%s13] sm:$0x1]
        %v1860 = vlaneseq
        %v1861 = vshrl.u32 %v1860, 7
        %v1862 = vsub.s32 0, %v1861
        %v1863 = vrot.slane %v1858, %v1862
        %v1866 = vsel %vm600, %v1853, 0
        %1868 = vmatprep.subr.mxu0 0.0
        %1869 = vmatpush1.msra.mxu0 %v1854
        %1870 = vmatprep.subr.mxu0 0.0
        %1871 = vmatpush1.msra.mxu0 %v1855
        %1872 = vmatprep.subr.mxu0 0.0
        %1873 = vmatpush1.msra.mxu0 %v1856
        %1874 = vmatprep.subr.mxu0 0.0
        %1875 = vmatpush1.msra.mxu0 %v1857
        %1876 = vmatprep.subr.mxu0 0.0
        %1877 = vmatpush1.msra.mxu0 0.0
        %1878 = vmatprep.subr.mxu0 0.0
        %1879 = vmatpush1.msra.mxu0 0.0
        %1880 = vmatprep.subr.mxu0 0.0
        %1881 = vmatpush1.msra.mxu0 0.0
        %1882 = vmatprep.subr.mxu0 0.0
        %1883 = vmatpush1.msra.mxu0 0.0
        %1884 = vmatprep.subr.mxu0 0.0
        %1885 = vmatpush1.msra.mxu0 0.0
        %1886 = vmatprep.subr.mxu0 0.0
        %1887 = vmatpush1.msra.mxu0 0.0
        %1888 = vmatprep.subr.mxu0 0.0
        %1889 = vmatpush1.msra.mxu0 0.0
        %1890 = vmatprep.subr.mxu0 0.0
        %1891 = vmatpush1.msra.mxu0 0.0
        %1892 = vmatprep.subr.mxu0 0.0
        %1893 = vmatpush1.msra.mxu0 0.0
        %1894 = vmatprep.subr.mxu0 0.0
        %1895 = vmatpush1.msra.mxu0 0.0
        %1896 = vmatprep.subr.mxu0 0.0
        %1897 = vmatpush1.msra.mxu0 0.0
        %1898 = vmatprep.subr.mxu0 0.0
        %1899 = vmatpush1.msra.mxu0 0.0
        %1900 = vmatprep.subr.mxu0 0.0
        %1901 = vmatpush1.msra.mxu0 0.0
        %1902 = vmatprep.subr.mxu0 0.0
        %1903 = vmatpush1.msra.mxu0 0.0
        %1904 = vmatprep.subr.mxu0 0.0
        %1905 = vmatpush1.msra.mxu0 0.0
        %1906 = vmatprep.subr.mxu0 0.0
        %1907 = vmatpush1.msra.mxu0 0.0
        %1908 = vmatprep.subr.mxu0 0.0
        %1909 = vmatpush1.msra.mxu0 0.0
        %1910 = vmatprep.subr.mxu0 0.0
        %1911 = vmatpush1.msra.mxu0 0.0
        %1912 = vmatprep.subr.mxu0 0.0
        %1913 = vmatpush1.msra.mxu0 0.0
        %1914 = vmatprep.subr.mxu0 0.0
        %1915 = vmatpush1.msra.mxu0 0.0
        %1916 = vmatprep.subr.mxu0 0.0
        %1917 = vmatpush1.msra.mxu0 0.0
        %1918 = vmatprep.subr.mxu0 0.0
        %1919 = vmatpush1.msra.mxu0 0.0
        %1920 = vmatprep.subr.mxu0 0.0
        %1921 = vmatpush1.msra.mxu0 0.0
        %1922 = vmatprep.subr.mxu0 0.0
        %1923 = vmatpush1.msra.mxu0 0.0
        %1924 = vmatprep.subr.mxu0 0.0
        %1925 = vmatpush1.msra.mxu0 0.0
        %1926 = vmatprep.subr.mxu0 0.0
        %1927 = vmatpush1.msra.mxu0 0.0
        %1928 = vmatprep.subr.mxu0 0.0
        %1929 = vmatpush1.msra.mxu0 0.0
        %1930 = vmatprep.subr.mxu0 0.0
        %1931 = vmatpush1.msra.mxu0 0.0
        %1932 = vmatprep.mubr.f32.mxu0 0.0
        %1933 = vmatmul.mubr.f32.gmra.mrb[0].mxu0 %v1866
        %v1934 = vpop.f32.mrb[0].mxu0
        %v1935 = vadd.f32 %v1863, %v1934
        %v1936 = vpop.f32.mrb[0].mxu0
        %1937 = vdwg.mxu0
        %v1938 = vmul.f32 %v1935, 0.5
        %v1939 = vrcp.pop 1.4142135
        %v1940 = vmul.f32 %v1935, %v1939
        %v1941 = verf.f32.pop %v1940
        %v1942 = vadd.f32 %v1941, 1.0
        %v1943 = vmul.f32 %v1938, %v1942
        %v1944 = vld [vmem:[%s14] sm:$0xff]
        %v1945 = vld [vmem:[%s14 + $0x8] sm:$0xff]
        %v1946 = vld [vmem:[%s14 + $0x10] sm:$0xff]
        %v1947 = vld [vmem:[%s14 + $0x18] sm:$0xff]
        %v1948 = vld [vmem:[%s14 + $0x20] sm:$0xff]
        %v1949 = vld [vmem:[%s14 + $0x28] sm:$0xff]
        %v1950 = vld [vmem:[%s14 + $0x30] sm:$0xff]
        %v1951 = vld [vmem:[%s14 + $0x38] sm:$0xff]
        %v1952 = vld [vmem:[%s14 + $0x40] sm:$0xff]
        %v1953 = vld [vmem:[%s14 + $0x48] sm:$0xff]
        %v1954 = vld [vmem:[%s14 + $0x50] sm:$0xff]
        %v1955 = vld [vmem:[%s14 + $0x58] sm:$0xff]
        %v1956 = vld [vmem:[%s14 + $0x60] sm:$0xff]
        %v1957 = vld [vmem:[%s14 + $0x68] sm:$0xff]
        %v1958 = vld [vmem:[%s14 + $0x70] sm:$0xff]
        %v1959 = vld [vmem:[%s14 + $0x78] sm:$0xff]
        %s1960 = scalar_lea.vmem %s12, 32
        %v1961 = vld [vmem:[%s1960] sm:$0xff]
        %v1962 = vld [vmem:[%s1960 + $0x8] sm:$0xff]
        %v1963 = vld [vmem:[%s1960 + $0x10] sm:$0xff]
        %v1964 = vld [vmem:[%s1960 + $0x18] sm:$0xff]
        %s1965 = scalar_lea.vmem %s13, 1
        %v1966 = vld [vmem:[%s1965] sm:$0x1]
        %v1968 = vlaneseq
        %v1969 = vshrl.u32 %v1968, 7
        %v1970 = vsub.s32 0, %v1969
        %v1971 = vrot.slane %v1966, %v1970
        %1973 = vmatprep.subr.mxu0 0.0
        %1974 = vmatpush1.msra.mxu0 %v1961
        %1975 = vmatprep.subr.mxu0 0.0
        %1976 = vmatpush1.msra.mxu0 %v1962
        %1977 = vmatprep.subr.mxu0 0.0
        %1978 = vmatpush1.msra.mxu0 %v1963
        %1979 = vmatprep.subr.mxu0 0.0
        %1980 = vmatpush1.msra.mxu0 %v1964
        %1981 = vmatprep.subr.mxu0 0.0
        %1982 = vmatpush1.msra.mxu0 0.0
        %1983 = vmatprep.subr.mxu0 0.0
        %1984 = vmatpush1.msra.mxu0 0.0
        %1985 = vmatprep.subr.mxu0 0.0
        %1986 = vmatpush1.msra.mxu0 0.0
        %1987 = vmatprep.subr.mxu0 0.0
        %1988 = vmatpush1.msra.mxu0 0.0
        %1989 = vmatprep.subr.mxu0 0.0
        %1990 = vmatpush1.msra.mxu0 0.0
        %1991 = vmatprep.subr.mxu0 0.0
        %1992 = vmatpush1.msra.mxu0 0.0
        %1993 = vmatprep.subr.mxu0 0.0
        %1994 = vmatpush1.msra.mxu0 0.0
        %1995 = vmatprep.subr.mxu0 0.0
        %1996 = vmatpush1.msra.mxu0 0.0
        %1997 = vmatprep.subr.mxu0 0.0
        %1998 = vmatpush1.msra.mxu0 0.0
        %1999 = vmatprep.subr.mxu0 0.0
        %2000 = vmatpush1.msra.mxu0 0.0
        %2001 = vmatprep.subr.mxu0 0.0
        %2002 = vmatpush1.msra.mxu0 0.0
        %2003 = vmatprep.subr.mxu0 0.0
        %2004 = vmatpush1.msra.mxu0 0.0
        %2005 = vmatprep.subr.mxu0 0.0
        %2006 = vmatpush1.msra.mxu0 0.0
        %2007 = vmatprep.subr.mxu0 0.0
        %2008 = vmatpush1.msra.mxu0 0.0
        %2009 = vmatprep.subr.mxu0 0.0
        %2010 = vmatpush1.msra.mxu0 0.0
        %2011 = vmatprep.subr.mxu0 0.0
        %2012 = vmatpush1.msra.mxu0 0.0
        %2013 = vmatprep.subr.mxu0 0.0
        %2014 = vmatpush1.msra.mxu0 0.0
        %2015 = vmatprep.subr.mxu0 0.0
        %2016 = vmatpush1.msra.mxu0 0.0
        %2017 = vmatprep.subr.mxu0 0.0
        %2018 = vmatpush1.msra.mxu0 0.0
        %2019 = vmatprep.subr.mxu0 0.0
        %2020 = vmatpush1.msra.mxu0 0.0
        %2021 = vmatprep.subr.mxu0 0.0
        %2022 = vmatpush1.msra.mxu0 0.0
        %2023 = vmatprep.subr.mxu0 0.0
        %2024 = vmatpush1.msra.mxu0 0.0
        %2025 = vmatprep.subr.mxu0 0.0
        %2026 = vmatpush1.msra.mxu0 0.0
        %2027 = vmatprep.subr.mxu0 0.0
        %2028 = vmatpush1.msra.mxu0 0.0
        %2029 = vmatprep.subr.mxu0 0.0
        %2030 = vmatpush1.msra.mxu0 0.0
        %2031 = vmatprep.subr.mxu0 0.0
        %2032 = vmatpush1.msra.mxu0 0.0
        %2033 = vmatprep.subr.mxu0 0.0
        %2034 = vmatpush1.msra.mxu0 0.0
        %2035 = vmatprep.subr.mxu0 0.0
        %2036 = vmatpush1.msra.mxu0 0.0
        %2037 = vmatprep.mubr.f32.mxu0 0.0
        %2038 = vmatmul.mubr.f32.gmra.mrb[0].mxu0 %v1866
        %v2039 = vpop.f32.mrb[0].mxu0
        %v2040 = vadd.f32 %v1971, %v2039
        %v2041 = vpop.f32.mrb[0].mxu0
        %2042 = vdwg.mxu0
        %v2043 = vmul.f32 %v2040, 0.5
        %v2044 = vmul.f32 %v2040, %v1939
        %v2045 = verf.f32.pop %v2044
        %v2046 = vadd.f32 %v2045, 1.0
        %v2047 = vmul.f32 %v2043, %v2046
        %s2048 = scalar_lea.vmem %s14, 128
        %v2049 = vld [vmem:[%s2048] sm:$0xff]
        %v2050 = vld [vmem:[%s2048 + $0x8] sm:$0xff]
        %v2051 = vld [vmem:[%s2048 + $0x10] sm:$0xff]
        %v2052 = vld [vmem:[%s2048 + $0x18] sm:$0xff]
        %v2053 = vld [vmem:[%s2048 + $0x20] sm:$0xff]
        %v2054 = vld [vmem:[%s2048 + $0x28] sm:$0xff]
        %v2055 = vld [vmem:[%s2048 + $0x30] sm:$0xff]
        %v2056 = vld [vmem:[%s2048 + $0x38] sm:$0xff]
        %v2057 = vld [vmem:[%s2048 + $0x40] sm:$0xff]
        %v2058 = vld [vmem:[%s2048 + $0x48] sm:$0xff]
        %v2059 = vld [vmem:[%s2048 + $0x50] sm:$0xff]
        %v2060 = vld [vmem:[%s2048 + $0x58] sm:$0xff]
        %v2061 = vld [vmem:[%s2048 + $0x60] sm:$0xff]
        %v2062 = vld [vmem:[%s2048 + $0x68] sm:$0xff]
        %v2063 = vld [vmem:[%s2048 + $0x70] sm:$0xff]
        %v2064 = vld [vmem:[%s2048 + $0x78] sm:$0xff]
        %2065 = vmatprep.subr.mxu0 0.0
        %2066 = vmatpush1.msra.mxu0 %v2049
        %2067 = vmatprep.subr.mxu0 0.0
        %2068 = vmatpush1.msra.mxu0 %v2050
        %2069 = vmatprep.subr.mxu0 0.0
        %2070 = vmatpush1.msra.mxu0 %v2051
        %2071 = vmatprep.subr.mxu0 0.0
        %2072 = vmatpush1.msra.mxu0 %v2052
        %2073 = vmatprep.subr.mxu0 0.0
        %2074 = vmatpush1.msra.mxu0 %v2053
        %2075 = vmatprep.subr.mxu0 0.0
        %2076 = vmatpush1.msra.mxu0 %v2054
        %2077 = vmatprep.subr.mxu0 0.0
        %2078 = vmatpush1.msra.mxu0 %v2055
        %2079 = vmatprep.subr.mxu0 0.0
        %2080 = vmatpush1.msra.mxu0 %v2056
        %2081 = vmatprep.subr.mxu0 0.0
        %2082 = vmatpush1.msra.mxu0 %v2057
        %2083 = vmatprep.subr.mxu0 0.0
        %2084 = vmatpush1.msra.mxu0 %v2058
        %2085 = vmatprep.subr.mxu0 0.0
        %2086 = vmatpush1.msra.mxu0 %v2059
        %2087 = vmatprep.subr.mxu0 0.0
        %2088 = vmatpush1.msra.mxu0 %v2060
        %2089 = vmatprep.subr.mxu0 0.0
        %2090 = vmatpush1.msra.mxu0 %v2061
        %2091 = vmatprep.subr.mxu0 0.0
        %2092 = vmatpush1.msra.mxu0 %v2062
        %2093 = vmatprep.subr.mxu0 0.0
        %2094 = vmatpush1.msra.mxu0 %v2063
        %2095 = vmatprep.subr.mxu0 0.0
        %2096 = vmatpush1.msra.mxu0 %v2064
        %2097 = vmatprep.subr.mxu0 0.0
        %2098 = vmatpush1.msra.mxu0 0.0
        %2099 = vmatprep.subr.mxu0 0.0
        %2100 = vmatpush1.msra.mxu0 0.0
        %2101 = vmatprep.subr.mxu0 0.0
        %2102 = vmatpush1.msra.mxu0 0.0
        %2103 = vmatprep.subr.mxu0 0.0
        %2104 = vmatpush1.msra.mxu0 0.0
        %2105 = vmatprep.subr.mxu0 0.0
        %2106 = vmatpush1.msra.mxu0 0.0
        %2107 = vmatprep.subr.mxu0 0.0
        %2108 = vmatpush1.msra.mxu0 0.0
        %2109 = vmatprep.subr.mxu0 0.0
        %2110 = vmatpush1.msra.mxu0 0.0
        %2111 = vmatprep.subr.mxu0 0.0
        %2112 = vmatpush1.msra.mxu0 0.0
        %2113 = vmatprep.subr.mxu0 0.0
        %2114 = vmatpush1.msra.mxu0 0.0
        %2115 = vmatprep.subr.mxu0 0.0
        %2116 = vmatpush1.msra.mxu0 0.0
        %2117 = vmatprep.subr.mxu0 0.0
        %2118 = vmatpush1.msra.mxu0 0.0
        %2119 = vmatprep.subr.mxu0 0.0
        %2120 = vmatpush1.msra.mxu0 0.0
        %2121 = vmatprep.subr.mxu0 0.0
        %2122 = vmatpush1.msra.mxu0 0.0
        %2123 = vmatprep.subr.mxu0 0.0
        %2124 = vmatpush1.msra.mxu0 0.0
        %2125 = vmatprep.subr.mxu0 0.0
        %2126 = vmatpush1.msra.mxu0 0.0
        %2127 = vmatprep.subr.mxu0 0.0
        %2128 = vmatpush1.msra.mxu0 0.0
        %2129 = vmatprep.mubr.f32.mxu0 0.0
        %2130 = vmatmul.mubr.f32.gmra.mrb[0].mxu0 %v2047
        %v2131 = vpop.f32.mrb[0].mxu0
        %v2132 = vadd.f32 0.0, %v2131
        %v2133 = vpop.f32.mrb[0].mxu0
        %2134 = vdwg.mxu0
        %2135 = vmatprep.subr.mxu0 0.0
        %2136 = vmatpush1.msra.mxu0 %v1944
        %2137 = vmatprep.subr.mxu0 0.0
        %2138 = vmatpush1.msra.mxu0 %v1945
        %2139 = vmatprep.subr.mxu0 0.0
        %2140 = vmatpush1.msra.mxu0 %v1946
        %2141 = vmatprep.subr.mxu0 0.0
        %2142 = vmatpush1.msra.mxu0 %v1947
        %2143 = vmatprep.subr.mxu0 0.0
        %2144 = vmatpush1.msra.mxu0 %v1948
        %2145 = vmatprep.subr.mxu0 0.0
        %2146 = vmatpush1.msra.mxu0 %v1949
        %2147 = vmatprep.subr.mxu0 0.0
        %2148 = vmatpush1.msra.mxu0 %v1950
        %2149 = vmatprep.subr.mxu0 0.0
        %2150 = vmatpush1.msra.mxu0 %v1951
        %2151 = vmatprep.subr.mxu0 0.0
        %2152 = vmatpush1.msra.mxu0 %v1952
        %2153 = vmatprep.subr.mxu0 0.0
        %2154 = vmatpush1.msra.mxu0 %v1953
        %2155 = vmatprep.subr.mxu0 0.0
        %2156 = vmatpush1.msra.mxu0 %v1954
        %2157 = vmatprep.subr.mxu0 0.0
        %2158 = vmatpush1.msra.mxu0 %v1955
        %2159 = vmatprep.subr.mxu0 0.0
        %2160 = vmatpush1.msra.mxu0 %v1956
        %2161 = vmatprep.subr.mxu0 0.0
        %2162 = vmatpush1.msra.mxu0 %v1957
        %2163 = vmatprep.subr.mxu0 0.0
        %2164 = vmatpush1.msra.mxu0 %v1958
        %2165 = vmatprep.subr.mxu0 0.0
        %2166 = vmatpush1.msra.mxu0 %v1959
        %2167 = vmatprep.subr.mxu0 0.0
        %2168 = vmatpush1.msra.mxu0 0.0
        %2169 = vmatprep.subr.mxu0 0.0
        %2170 = vmatpush1.msra.mxu0 0.0
        %2171 = vmatprep.subr.mxu0 0.0
        %2172 = vmatpush1.msra.mxu0 0.0
        %2173 = vmatprep.subr.mxu0 0.0
        %2174 = vmatpush1.msra.mxu0 0.0
        %2175 = vmatprep.subr.mxu0 0.0
        %2176 = vmatpush1.msra.mxu0 0.0
        %2177 = vmatprep.subr.mxu0 0.0
        %2178 = vmatpush1.msra.mxu0 0.0
        %2179 = vmatprep.subr.mxu0 0.0
        %2180 = vmatpush1.msra.mxu0 0.0
        %2181 = vmatprep.subr.mxu0 0.0
        %2182 = vmatpush1.msra.mxu0 0.0
        %2183 = vmatprep.subr.mxu0 0.0
        %2184 = vmatpush1.msra.mxu0 0.0
        %2185 = vmatprep.subr.mxu0 0.0
        %2186 = vmatpush1.msra.mxu0 0.0
        %2187 = vmatprep.subr.mxu0 0.0
        %2188 = vmatpush1.msra.mxu0 0.0
        %2189 = vmatprep.subr.mxu0 0.0
        %2190 = vmatpush1.msra.mxu0 0.0
        %2191 = vmatprep.subr.mxu0 0.0
        %2192 = vmatpush1.msra.mxu0 0.0
        %2193 = vmatprep.subr.mxu0 0.0
        %2194 = vmatpush1.msra.mxu0 0.0
        %2195 = vmatprep.subr.mxu0 0.0
        %2196 = vmatpush1.msra.mxu0 0.0
        %2197 = vmatprep.subr.mxu0 0.0
        %2198 = vmatpush1.msra.mxu0 0.0
        %2199 = vmatprep.mubr.f32.mxu0 0.0
        %2200 = vmatmul.mubr.f32.gmra.mrb[0].mxu0 %v1943
        %v2201 = vpop.f32.mrb[0].mxu0
        %v2202 = vadd.f32 %v2132, %v2201
        %v2203 = vpop.f32.mrb[0].mxu0
        %2204 = vdwg.mxu0
        %v2205 = vld [vmem:[%s15] sm:$0x1]
        %v2207 = vlaneseq
        %v2208 = vshrl.u32 %v2207, 7
        %v2209 = vsub.s32 0, %v2208
        %v2210 = vrot.slane %v2205, %v2209
        %v2212 = vadd.f32 %v2202, %v2210
        %v2213 = vld [vmem:[%s16] sm:$0x1]
        %v2214 = vld [vmem:[%s17] sm:$0x1]
        %v2215 = vsel %vm600, %v2212, 0.0
        %2216 = vadd.xlane.f32.xlu0 %v2215
        %v2217 = vpop.xlane.xlu0 %2216
        %v2218 = vmul.f32 %v2217, %v1828
        %v2219 = vsub.f32 %v2212, %v2218
        %v2220 = vmul.f32 %v2219, %v2219
        %v2221 = vsel %vm600, %v2220, 0.0
        %2222 = vadd.xlane.f32.xlu0 %v2221
        %v2223 = vpop.xlane.xlu0 %2222
        %v2224 = vmul.f32 %v2223, %v1828
        %v2225 = vadd.f32 %v2224, 1e-06
        %v2226 = vrsqrt.pop %v2225
        %v2227 = vmul.f32 %v2219, %v2226
        %v2229 = vlaneseq
        %v2230 = vshrl.u32 %v2229, 7
        %v2231 = vsub.s32 0, %v2230
        %v2232 = vrot.slane %v2213, %v2231
        %v2234 = vmul.f32 %v2227, %v2232
        %v2236 = vlaneseq
        %v2237 = vshrl.u32 %v2236, 7
        %v2238 = vsub.s32 0, %v2237
        %v2239 = vrot.slane %v2214, %v2238
        %v2241 = vadd.f32 %v2234, %v2239
        %v2242 = vadd.f32 %v1853, %v2241
        %2243 = vst.msk [vmem:[%s579] sm:$0xff] %vm600, %v2242
        %s2244 = sand.u32 %s428, 1
        %s2245 = scalar_lea.sflag [#allocation6], %s2244
        %s2246 = sand.u32 %s428, 1
        %s2247 = smul.addr %s2246, 8
        %s2248 = scalar_lea.vmem [#allocation5], %s2247
        // Predicated region
        $region93: #{tpu_custom_call.1} parent=91 // pred_check
          %p2249 = pneg %p438
        $region94: #{tpu_custom_call.1} parent=91 // pred_check_branch
          %2251 = sbr.rel (%p2249) target = $region96
        $region95: #{tpu_custom_call.1} parent=91 // pred_region
          %s2253 = ssub.s32 128, 128
          %2254 = vsyncadd %s2245, %s2253
          %s2255 = smul.addr %s32, 128
          %s2256 = scalar_lea.hbm %s18, %s2255
          %s2258 = sshll.u32 %s2248, 4
          %s2259 = int_to_ptr.vmem [resolvable:$true] %s2258
          %2261 = dma.vmem_to_hbm [thread:$0]  %s2259, 128, %s2256, %s2245
        $region96: #{tpu_custom_call.1} parent=91 // pred_fallthru
          _
      $region92: #{tpu_custom_call.1} parent=5 // pred_fallthru
        _
      %p2262 = scmp.le.s32.totalorder 2, %s27
      // Predicated region
      $region97: #{tpu_custom_call.1} parent=5 // pred_check
        %p2263 = pneg %p2262
      $region98: #{tpu_custom_call.1} parent=5 // pred_check_branch
        %2265 = sbr.rel (%p2263) target = $region100
      $region99: #{tpu_custom_call.1} parent=5 // pred_region
        %s2266 = ssub.s32 %s27, 2
        // Predicated region
        $region101: #{tpu_custom_call.1} parent=99 // pred_check
          %p2267 = pneg %p444
        $region102: #{tpu_custom_call.1} parent=99 // pred_check_branch
          %2269 = sbr.rel (%p2267) target = $region104
        $region103: #{tpu_custom_call.1} parent=99 // pred_region
          %s2270 = sand.u32 %s429, 1
          %s2271 = scalar_lea.sflag [#allocation6], %s2270
          %s2272 = sand.u32 %s429, 1
          %s2273 = smul.addr %s2272, 8
          %s2274 = scalar_lea.vmem [#allocation5], %s2273
          %2275 = dma.done %s2271, 128
        $region104: #{tpu_custom_call.1} parent=99 // pred_fallthru
          _
      $region100: #{tpu_custom_call.1} parent=5 // pred_fallthru
        _
    $region6: #{tpu_custom_call.1} parent=1 // loop_footer
      %s31 = sadd.s32 1, %s27
    $region7: #{tpu_custom_call.1} parent=1 // loop_footer_branch
      %26 = sbr.rel target = $region3
    $region8: #{tpu_custom_call.1} parent=1 // loop_exit
      _
    %2276 = vsyncpa [#allocation6], 1
    %s2277 = scalar_lea.sflag [#allocation6], 1
    %2278 = vsyncpa %s2277, 1

</llo_original>
